<compile_context>
chip_gen: v5e
topology: v5e:2x2
jax: 0.10.0
libtpu: 0.0.40
codegen_flags: <defaults>
</compile_context>

<pallas_src>
import functools
import math

import jax
import jax.numpy as jnp
from jax.experimental import pallas as pl
from jax.experimental.pallas import tpu as pltpu


# ---------------------------------------------------------------------------
# Fused TemporalBlock kernel (optionally with the linear + log_softmax head)
# ---------------------------------------------------------------------------

def _block_kernel(x_ref, w1_ref, b1_ref, w2_ref, b2_ref, *rest,
                  ksize, dil, length, has_down, final_head):
    idx = 0
    if has_down:
        wd_ref, bd_ref = rest[0], rest[1]
        idx = 2
    if final_head:
        wl_ref, bl_ref = rest[idx], rest[idx + 1]
        idx += 2
    o_ref = rest[idx]

    pad = (ksize - 1) * dil
    L = length
    ext = pad + L          # conv1 is evaluated on an extended output window

    # ---- conv1 (+ fused chomp) + bias + relu over [-pad, L) -----------------
    acc1 = jnp.dot(w1_ref[0], x_ref[:, 0:ext],
                   preferred_element_type=jnp.float32)
    for j in range(1, ksize):                       # static unroll, K is tiny
        acc1 = acc1 + jnp.dot(w1_ref[j], x_ref[:, j * dil: j * dil + ext],
                              preferred_element_type=jnp.float32)
    h1 = jnp.maximum(acc1 + b1_ref[...], 0.0)       # (C_mid, pad + L), f32
    # In the reference model conv2's zero padding is applied to h1 itself,
    # i.e. h1(t < 0) == 0 (NOT conv1 extrapolated, which would give relu(b1)).
    col = jax.lax.broadcasted_iota(jnp.int32, h1.shape, 1)
    h1 = jnp.where(col >= pad, h1, 0.0)

    # ---- conv2 (+ fused chomp) + bias + relu over [0, L) --------------------
    acc2 = jnp.dot(w2_ref[0], h1[:, 0:L], preferred_element_type=jnp.float32)
    for j in range(1, ksize):
        acc2 = acc2 + jnp.dot(w2_ref[j], h1[:, j * dil: j * dil + L],
                              preferred_element_type=jnp.float32)
    h2 = jnp.maximum(acc2 + b2_ref[...], 0.0)       # (C_out, L), f32

    # ---- residual (identity or fused 1x1 projection) + final relu -----------
    x_res = x_ref[:, 2 * pad: 2 * pad + L]          # the un-padded input slab
    if has_down:
        res = (jnp.dot(wd_ref[...], x_res, preferred_element_type=jnp.float32)
               + bd_ref[...])
    else:
        res = x_res.astype(jnp.float32)
    y = jnp.maximum(h2 + res, 0.0)                  # (C_out, L), f32

    if final_head:
        # linear + log_softmax on the last-time-step features (per sample).
        feats = y[:, L - 1:L]                                        # (C_out, 1)
        logits = (jnp.dot(wl_ref[...], feats,
                          preferred_element_type=jnp.float32)
                  + bl_ref[...])                                     # (O, 1)
        m = jnp.max(logits, axis=0, keepdims=True)
        z = logits - m
        lse = jnp.log(jnp.sum(jnp.exp(z), axis=0, keepdims=True))
        o_ref[...] = (z - lse).astype(o_ref.dtype)                   # (O, 1)
    else:
        o_ref[...] = y.astype(o_ref.dtype)                           # (C_out, L)


# ---------------------------------------------------------------------------
# Wrappers
# ---------------------------------------------------------------------------

def _weight_norm(v, g):
    # torch.nn.utils.weight_norm (dim=0): w = g * v / ||v||, norm per out channel.
    norm = jnp.sqrt(jnp.sum(v * v, axis=(1, 2), keepdims=True))
    return v * (g.reshape(-1, 1, 1) / norm)


def _vmem_limit_bytes(per_step_bytes):
    # >=25% headroom under the chip's physical VMEM (v7x: 64 MiB/TC, v5e/v6e:
    # 128 MiB) rather than a hard-coded v7x-sized clamp for every generation.
    try:
        cap = int(getattr(pltpu.get_tpu_info(), "vmem_capacity_bytes",
                          64 * 2 ** 20))
    except Exception:
        cap = 64 * 2 ** 20
    ceiling = (cap * 3) // 4
    want = max(32 * 2 ** 20, 6 * int(per_step_bytes))
    return int(min(ceiling, want))


def temporal_block(x, blk, dilation, head=None):
    """One fused TemporalBlock.  If `head=(lin_w, lin_b)` is given this is the
    final block: it also applies linear + log_softmax to the last time step and
    returns (N, output_size, 1) instead of the full (N, C_out, L) activation."""
    n, c_in, length = x.shape
    w1 = _weight_norm(blk["conv1_v"], blk["conv1_g"])     # (C_out, C_in, K)
    w2 = _weight_norm(blk["conv2_v"], blk["conv2_g"])     # (C_out, C_out, K)
    c_out, _, ksize = w1.shape
    pad = (ksize - 1) * dilation

    # Single wrapper-side causal left pad by 2*pad (see kernel design note).
    x2 = jnp.pad(x, ((0, 0), (0, 0), (2 * pad, 0)))
    w1_t = jnp.transpose(w1, (2, 0, 1))                   # (K, C_out, C_in)
    w2_t = jnp.transpose(w2, (2, 0, 1))                   # (K, C_out, C_out)
    b1 = blk["conv1_b"].reshape(c_out, 1)
    b2 = blk["conv2_b"].reshape(c_out, 1)

    has_down = "down_w" in blk
    final_head = head is not None

    in_specs = [
        pl.BlockSpec((None, c_in, length + 2 * pad), lambda i: (i, 0, 0)),
        pl.BlockSpec((ksize, c_out, c_in), lambda i: (0, 0, 0)),
        pl.BlockSpec((c_out, 1), lambda i: (0, 0)),
        pl.BlockSpec((ksize, c_out, c_out), lambda i: (0, 0, 0)),
        pl.BlockSpec((c_out, 1), lambda i: (0, 0)),
    ]
    args = [x2, w1_t, b1, w2_t, b2]

    if has_down:
        in_specs += [pl.BlockSpec((c_out, c_in), lambda i: (0, 0)),
                     pl.BlockSpec((c_out, 1), lambda i: (0, 0))]
        args += [blk["down_w"], blk["down_b"].reshape(c_out, 1)]

    if final_head:
        lin_w, lin_b = head
        o_dim = lin_w.shape[0]
        in_specs += [pl.BlockSpec((o_dim, c_out), lambda i: (0, 0)),
                     pl.BlockSpec((o_dim, 1), lambda i: (0, 0))]
        args += [lin_w, lin_b.reshape(o_dim, 1)]
        out_shape = jax.ShapeDtypeStruct((n, o_dim, 1), x.dtype)
        out_spec = pl.BlockSpec((None, o_dim, 1), lambda i: (i, 0, 0))
    else:
        out_shape = jax.ShapeDtypeStruct((n, c_out, length), x.dtype)
        out_spec = pl.BlockSpec((None, c_out, length), lambda i: (i, 0, 0))

    itemsize = jnp.dtype(x.dtype).itemsize
    per_step = (c_in * (length + 2 * pad) * itemsize
                + sum(int(math.prod(a.shape)) * jnp.dtype(a.dtype).itemsize
                      for a in args[1:])
                + int(math.prod(out_shape.shape[1:])) * itemsize
                + 4 * (c_out * (pad + length)      # h1 value
                       + 2 * c_out * length        # h2 / y values
                       + c_in * length))           # residual slab

    kernel = functools.partial(
        _block_kernel, ksize=ksize, dil=dilation, length=length,
        has_down=has_down, final_head=final_head)

    return pl.pallas_call(
        kernel,
        out_shape=out_shape,
        grid=(n,),
        in_specs=in_specs,
        out_specs=out_spec,
        compiler_params=pltpu.CompilerParams(
            dimension_semantics=("parallel",),
            vmem_limit_bytes=_vmem_limit_bytes(per_step)),
    )(*args)


def tcn_forward(x, params):
    """TCN.forward (eval mode): stacked TemporalBlocks -> last time step ->
    linear -> log_softmax.  Returns (N, output_size) log-probabilities."""
    blocks = params["blocks"]
    y = x
    for i, blk in enumerate(blocks):
        is_final = i == len(blocks) - 1
        y = temporal_block(
            y, blk, dilation=2 ** i,
            head=(params["lin_w"], params["lin_b"]) if is_final else None)
    return y[:, :, 0]   # (N, output_size)


# ---------------------------------------------------------------------------
# Pure-JAX reference (mirrors the PyTorch module, eval mode)
# ---------------------------------------------------------------------------

def _ref_causal_conv(x, w, b, dil):
    n, c_in, length = x.shape
    c_out, _, k = w.shape
    pad = (k - 1) * dil
    xp = jnp.pad(x, ((0, 0), (0, 0), (pad, 0)))
    out = jnp.zeros((n, c_out, length), jnp.float32)
    for j in range(k):
        out = out + jnp.einsum("oc,ncl->nol", w[:, :, j],
                               xp[:, :, j * dil: j * dil + length])
    return out + b.reshape(1, -1, 1)


def tcn_forward_ref(x, params):
    y = x
    for i, blk in enumerate(params["blocks"]):
        dil = 2 ** i
        w1 = _weight_norm(blk["conv1_v"], blk["conv1_g"])
        w2 = _weight_norm(blk["conv2_v"], blk["conv2_g"])
        h1 = jax.nn.relu(_ref_causal_conv(y, w1, blk["conv1_b"], dil))
        h2 = jax.nn.relu(_ref_causal_conv(h1, w2, blk["conv2_b"], dil))
        if "down_w" in blk:
            res = (jnp.einsum("oc,ncl->nol", blk["down_w"], y)
                   + blk["down_b"].reshape(1, -1, 1))
        else:
            res = y
        y = jax.nn.relu(h2 + res)
    feats = y[:, :, -1]
    logits = feats @ params["lin_w"].T + params["lin_b"]
    return jax.nn.log_softmax(logits, axis=1)


# ---------------------------------------------------------------------------
# Parameter construction + demo
# ---------------------------------------------------------------------------

def init_params(key, input_size, output_size, num_channels, kernel_size):
    params = {"blocks": []}
    in_c = input_size
    for out_c in num_channels:
        key, *ks = jax.random.split(key, 9)
        blk = {
            "conv1_v": 0.01 * jax.random.normal(ks[0], (out_c, in_c, kernel_size), jnp.float32),
            "conv1_g": 0.5 + jax.random.uniform(ks[1], (out_c,), jnp.float32),
            "conv1_b": 0.01 * jax.random.normal(ks[2], (out_c,), jnp.float32),
            "conv2_v": 0.01 * jax.random.normal(ks[3], (out_c, out_c, kernel_size), jnp.float32),
            "conv2_g": 0.5 + jax.random.uniform(ks[4], (out_c,), jnp.float32),
            "conv2_b": 0.01 * jax.random.normal(ks[5], (out_c,), jnp.float32),
        }
        if in_c != out_c:  # downsample = Conv1d(in_c, out_c, 1)
            blk["down_w"] = 0.01 * jax.random.normal(ks[6], (out_c, in_c), jnp.float32)
            blk["down_b"] = 0.01 * jax.random.normal(ks[7], (out_c,), jnp.float32)
        params["blocks"].append(blk)
        in_c = out_c
    key, k1, k2 = jax.random.split(key, 3)
    params["lin_w"] = 0.1 * jax.random.normal(k1, (output_size, num_channels[-1]), jnp.float32)
    params["lin_b"] = 0.01 * jax.random.normal(k2, (output_size,), jnp.float32)
    return params


if __name__ == "__main__":
    key = jax.random.PRNGKey(0)
    N, C_IN, L = 2, 4, 16
    KSIZE = 2
    # block 0: 4->8 (projected residual); blocks 1,2: 8->8 (identity residual);
    # block 2 additionally carries the fused linear + log_softmax head.
    NUM_CHANNELS = [8, 8, 8]
    OUTPUT_SIZE = 10

    key, kx, kp = jax.random.split(key, 3)
    x = jax.random.normal(kx, (N, C_IN, L), dtype=jnp.float32)
    params = init_params(kp, C_IN, OUTPUT_SIZE, NUM_CHANNELS, KSIZE)

    out = jax.jit(tcn_forward)(x, params)
    out = jax.block_until_ready(out)

    ref = tcn_forward_ref(x, params)
    assert out.shape == (N, OUTPUT_SIZE), out.shape
    assert jnp.allclose(out, ref, atol=1e-5, rtol=1e-5), float(jnp.max(jnp.abs(out - ref)))
    assert jnp.allclose(jnp.sum(jnp.exp(out), axis=1), 1.0, atol=1e-5)

    print("KERNEL_OK")
</pallas_src>

<mosaic_0001>
module attributes {stable_mosaic.version = 11 : i64} {
  func.func @_block_kernel(%arg0: i32, %arg1: memref<1x4x18xf32, #tpu.memory_space<vmem>>, %arg2: memref<2x8x4xf32, #tpu.memory_space<vmem>>, %arg3: memref<8x1xf32, #tpu.memory_space<vmem>>, %arg4: memref<2x8x8xf32, #tpu.memory_space<vmem>>, %arg5: memref<8x1xf32, #tpu.memory_space<vmem>>, %arg6: memref<8x4xf32, #tpu.memory_space<vmem>>, %arg7: memref<8x1xf32, #tpu.memory_space<vmem>>, %arg8: memref<1x8x16xf32, #tpu.memory_space<vmem>>) attributes {dimension_semantics = [#tpu.dimension_semantics<parallel>], iteration_bounds = array<i64: 2>, scalar_prefetch = 0 : i64, scratch_operands = 0 : i64, tpu.core_type = #tpu.core_type<tc>, window_params = [{transform_indices = @transform_0, window_bounds = array<i64: 1, 4, 18>}, {pipeline_mode = #tpu.pipeline_mode<synchronous>, transform_indices = @transform_1, window_bounds = array<i64: 2, 8, 4>}, {pipeline_mode = #tpu.pipeline_mode<synchronous>, transform_indices = @transform_2, window_bounds = array<i64: 8, 1>}, {pipeline_mode = #tpu.pipeline_mode<synchronous>, transform_indices = @transform_3, window_bounds = array<i64: 2, 8, 8>}, {pipeline_mode = #tpu.pipeline_mode<synchronous>, transform_indices = @transform_4, window_bounds = array<i64: 8, 1>}, {pipeline_mode = #tpu.pipeline_mode<synchronous>, transform_indices = @transform_5, window_bounds = array<i64: 8, 4>}, {pipeline_mode = #tpu.pipeline_mode<synchronous>, transform_indices = @transform_6, window_bounds = array<i64: 8, 1>}, {transform_indices = @transform_7, window_bounds = array<i64: 1, 8, 16>}]} {
    %c0 = arith.constant 0 : index
    %c0_0 = arith.constant 0 : index
    %c0_1 = arith.constant 0 : index
    %0 = vector.load %arg2[%c0, %c0_0, %c0_1] : memref<2x8x4xf32, #tpu.memory_space<vmem>>, vector<1x8x4xf32>
    %1 = vector.shape_cast %0 : vector<1x8x4xf32> to vector<8x4xf32>
    %c0_2 = arith.constant 0 : index
    %c0_3 = arith.constant 0 : index
    %c0_4 = arith.constant 0 : index
    %2 = vector.load %arg1[%c0_2, %c0_3, %c0_4] : memref<1x4x18xf32, #tpu.memory_space<vmem>>, vector<1x4x17xf32>
    %3 = vector.shape_cast %2 : vector<1x4x17xf32> to vector<4x17xf32>
    %cst = arith.constant dense<0.000000e+00> : vector<8x17xf32>
    %4 = tpu.matmul %1, %3, %cst {dimension_numbers = #tpu.dot_dimension_numbers<[1], [0], [0], [1], [0, 0, 1, 1], [], []>} : vector<8x4xf32>, vector<4x17xf32>, vector<8x17xf32> -> vector<8x17xf32>
    %c1 = arith.constant 1 : index
    %c0_5 = arith.constant 0 : index
    %c0_6 = arith.constant 0 : index
    %5 = vector.load %arg2[%c1, %c0_5, %c0_6] : memref<2x8x4xf32, #tpu.memory_space<vmem>>, vector<1x8x4xf32>
    %6 = vector.shape_cast %5 : vector<1x8x4xf32> to vector<8x4xf32>
    %c0_7 = arith.constant 0 : index
    %c0_8 = arith.constant 0 : index
    %c1_9 = arith.constant 1 : index
    %7 = vector.load %arg1[%c0_7, %c0_8, %c1_9] : memref<1x4x18xf32, #tpu.memory_space<vmem>>, vector<1x4x17xf32>
    %8 = vector.shape_cast %7 : vector<1x4x17xf32> to vector<4x17xf32>
    %cst_10 = arith.constant dense<0.000000e+00> : vector<8x17xf32>
    %9 = tpu.matmul %6, %8, %cst_10 {dimension_numbers = #tpu.dot_dimension_numbers<[1], [0], [0], [1], [0, 0, 1, 1], [], []>} : vector<8x4xf32>, vector<4x17xf32>, vector<8x17xf32> -> vector<8x17xf32>
    %10 = arith.addf %4, %9 : vector<8x17xf32>
    %c0_11 = arith.constant 0 : index
    %c0_12 = arith.constant 0 : index
    %11 = vector.load %arg3[%c0_11, %c0_12] : memref<8x1xf32, #tpu.memory_space<vmem>>, vector<8x1xf32>
    %12 = vector.broadcast %11 : vector<8x1xf32> to vector<8x17xf32>
    %13 = arith.addf %10, %12 : vector<8x17xf32>
    %cst_13 = arith.constant 0.000000e+00 : f32
    %14 = vector.broadcast %cst_13 : f32 to vector<8x17xf32>
    %15 = arith.maximumf %13, %14 : vector<8x17xf32>
    %16 = tpu.iota {dimensions = array<i32: 1>} : vector<8x17xi32>
    %c1_i32 = arith.constant 1 : i32
    %17 = vector.broadcast %c1_i32 : i32 to vector<8x17xi32>
    %18 = arith.cmpi sge, %16, %17 : vector<8x17xi32>
    %cst_14 = arith.constant 0.000000e+00 : f32
    %19 = vector.broadcast %cst_14 : f32 to vector<8x17xf32>
    %20 = arith.select %18, %15, %19 : vector<8x17xi1>, vector<8x17xf32>
    %c0_15 = arith.constant 0 : index
    %c0_16 = arith.constant 0 : index
    %c0_17 = arith.constant 0 : index
    %21 = vector.load %arg4[%c0_15, %c0_16, %c0_17] : memref<2x8x8xf32, #tpu.memory_space<vmem>>, vector<1x8x8xf32>
    %22 = vector.shape_cast %21 : vector<1x8x8xf32> to vector<8x8xf32>
    %23 = vector.extract_strided_slice %20 {offsets = [0, 0], sizes = [8, 16], strides = [1, 1]} : vector<8x17xf32> to vector<8x16xf32>
    %cst_18 = arith.constant dense<0.000000e+00> : vector<8x16xf32>
    %24 = tpu.matmul %22, %23, %cst_18 {dimension_numbers = #tpu.dot_dimension_numbers<[1], [0], [0], [1], [0, 0, 1, 1], [], []>} : vector<8x8xf32>, vector<8x16xf32>, vector<8x16xf32> -> vector<8x16xf32>
    %c1_19 = arith.constant 1 : index
    %c0_20 = arith.constant 0 : index
    %c0_21 = arith.constant 0 : index
    %25 = vector.load %arg4[%c1_19, %c0_20, %c0_21] : memref<2x8x8xf32, #tpu.memory_space<vmem>>, vector<1x8x8xf32>
    %26 = vector.shape_cast %25 : vector<1x8x8xf32> to vector<8x8xf32>
    %27 = vector.extract_strided_slice %20 {offsets = [0, 1], sizes = [8, 16], strides = [1, 1]} : vector<8x17xf32> to vector<8x16xf32>
    %cst_22 = arith.constant dense<0.000000e+00> : vector<8x16xf32>
    %28 = tpu.matmul %26, %27, %cst_22 {dimension_numbers = #tpu.dot_dimension_numbers<[1], [0], [0], [1], [0, 0, 1, 1], [], []>} : vector<8x8xf32>, vector<8x16xf32>, vector<8x16xf32> -> vector<8x16xf32>
    %29 = arith.addf %24, %28 : vector<8x16xf32>
    %c0_23 = arith.constant 0 : index
    %c0_24 = arith.constant 0 : index
    %30 = vector.load %arg5[%c0_23, %c0_24] : memref<8x1xf32, #tpu.memory_space<vmem>>, vector<8x1xf32>
    %31 = vector.broadcast %30 : vector<8x1xf32> to vector<8x16xf32>
    %32 = arith.addf %29, %31 : vector<8x16xf32>
    %cst_25 = arith.constant 0.000000e+00 : f32
    %33 = vector.broadcast %cst_25 : f32 to vector<8x16xf32>
    %34 = arith.maximumf %32, %33 : vector<8x16xf32>
    %c0_26 = arith.constant 0 : index
    %c0_27 = arith.constant 0 : index
    %c2 = arith.constant 2 : index
    %35 = vector.load %arg1[%c0_26, %c0_27, %c2] : memref<1x4x18xf32, #tpu.memory_space<vmem>>, vector<1x4x16xf32>
    %36 = vector.shape_cast %35 : vector<1x4x16xf32> to vector<4x16xf32>
    %c0_28 = arith.constant 0 : index
    %c0_29 = arith.constant 0 : index
    %37 = vector.load %arg6[%c0_28, %c0_29] : memref<8x4xf32, #tpu.memory_space<vmem>>, vector<8x4xf32>
    %cst_30 = arith.constant dense<0.000000e+00> : vector<8x16xf32>
    %38 = tpu.matmul %37, %36, %cst_30 {dimension_numbers = #tpu.dot_dimension_numbers<[1], [0], [0], [1], [0, 0, 1, 1], [], []>} : vector<8x4xf32>, vector<4x16xf32>, vector<8x16xf32> -> vector<8x16xf32>
    %c0_31 = arith.constant 0 : index
    %c0_32 = arith.constant 0 : index
    %39 = vector.load %arg7[%c0_31, %c0_32] : memref<8x1xf32, #tpu.memory_space<vmem>>, vector<8x1xf32>
    %40 = vector.broadcast %39 : vector<8x1xf32> to vector<8x16xf32>
    %41 = arith.addf %38, %40 : vector<8x16xf32>
    %42 = arith.addf %34, %41 : vector<8x16xf32>
    %cst_33 = arith.constant 0.000000e+00 : f32
    %43 = vector.broadcast %cst_33 : f32 to vector<8x16xf32>
    %44 = arith.maximumf %42, %43 : vector<8x16xf32>
    %c0_34 = arith.constant 0 : index
    %c0_35 = arith.constant 0 : index
    %c0_36 = arith.constant 0 : index
    %45 = vector.load %arg8[%c0_34, %c0_35, %c0_36] : memref<1x8x16xf32, #tpu.memory_space<vmem>>, vector<1x8x16xf32>
    %46 = vector.shape_cast %45 : vector<1x8x16xf32> to vector<8x16xf32>
    %47 = vector.shape_cast %44 : vector<8x16xf32> to vector<1x8x16xf32>
    tpu.vector_store %arg8[%c0_34, %c0_35, %c0_36], %47 {strides = array<i32>} : memref<1x8x16xf32, #tpu.memory_space<vmem>>, vector<1x8x16xf32>,
    return
  }
  func.func @transform_0(%arg0: i32) -> (i32, i32, i32) {
    %c0_i32 = arith.constant 0 : i32
    %c0_i32_0 = arith.constant 0 : i32
    %c0_i32_1 = arith.constant 0 : i32
    return %arg0, %c0_i32, %c0_i32_0 : i32, i32, i32
  }
  func.func @transform_1(%arg0: i32) -> (i32, i32, i32) {
    %c0_i32 = arith.constant 0 : i32
    %c0_i32_0 = arith.constant 0 : i32
    %c0_i32_1 = arith.constant 0 : i32
    %c0_i32_2 = arith.constant 0 : i32
    return %c0_i32, %c0_i32_0, %c0_i32_1 : i32, i32, i32
  }
  func.func @transform_2(%arg0: i32) -> (i32, i32) {
    %c0_i32 = arith.constant 0 : i32
    %c0_i32_0 = arith.constant 0 : i32
    %c0_i32_1 = arith.constant 0 : i32
    return %c0_i32, %c0_i32_0 : i32, i32
  }
  func.func @transform_3(%arg0: i32) -> (i32, i32, i32) {
    %c0_i32 = arith.constant 0 : i32
    %c0_i32_0 = arith.constant 0 : i32
    %c0_i32_1 = arith.constant 0 : i32
    %c0_i32_2 = arith.constant 0 : i32
    return %c0_i32, %c0_i32_0, %c0_i32_1 : i32, i32, i32
  }
  func.func @transform_4(%arg0: i32) -> (i32, i32) {
    %c0_i32 = arith.constant 0 : i32
    %c0_i32_0 = arith.constant 0 : i32
    %c0_i32_1 = arith.constant 0 : i32
    return %c0_i32, %c0_i32_0 : i32, i32
  }
  func.func @transform_5(%arg0: i32) -> (i32, i32) {
    %c0_i32 = arith.constant 0 : i32
    %c0_i32_0 = arith.constant 0 : i32
    %c0_i32_1 = arith.constant 0 : i32
    return %c0_i32, %c0_i32_0 : i32, i32
  }
  func.func @transform_6(%arg0: i32) -> (i32, i32) {
    %c0_i32 = arith.constant 0 : i32
    %c0_i32_0 = arith.constant 0 : i32
    %c0_i32_1 = arith.constant 0 : i32
    return %c0_i32, %c0_i32_0 : i32, i32
  }
  func.func @transform_7(%arg0: i32) -> (i32, i32, i32) {
    %c0_i32 = arith.constant 0 : i32
    %c0_i32_0 = arith.constant 0 : i32
    %c0_i32_1 = arith.constant 0 : i32
    return %arg0, %c0_i32, %c0_i32_0 : i32, i32, i32
  }
}

module attributes {stable_mosaic.version = 11 : i64} {
  func.func @_block_kernel(%arg0: i32, %arg1: memref<1x8x20xf32, #tpu.memory_space<vmem>>, %arg2: memref<2x8x8xf32, #tpu.memory_space<vmem>>, %arg3: memref<8x1xf32, #tpu.memory_space<vmem>>, %arg4: memref<2x8x8xf32, #tpu.memory_space<vmem>>, %arg5: memref<8x1xf32, #tpu.memory_space<vmem>>, %arg6: memref<1x8x16xf32, #tpu.memory_space<vmem>>) attributes {dimension_semantics = [#tpu.dimension_semantics<parallel>], iteration_bounds = array<i64: 2>, scalar_prefetch = 0 : i64, scratch_operands = 0 : i64, tpu.core_type = #tpu.core_type<tc>, window_params = [{transform_indices = @transform_0, window_bounds = array<i64: 1, 8, 20>}, {pipeline_mode = #tpu.pipeline_mode<synchronous>, transform_indices = @transform_1, window_bounds = array<i64: 2, 8, 8>}, {pipeline_mode = #tpu.pipeline_mode<synchronous>, transform_indices = @transform_2, window_bounds = array<i64: 8, 1>}, {pipeline_mode = #tpu.pipeline_mode<synchronous>, transform_indices = @transform_3, window_bounds = array<i64: 2, 8, 8>}, {pipeline_mode = #tpu.pipeline_mode<synchronous>, transform_indices = @transform_4, window_bounds = array<i64: 8, 1>}, {transform_indices = @transform_5, window_bounds = array<i64: 1, 8, 16>}]} {
    %c0 = arith.constant 0 : index
    %c0_0 = arith.constant 0 : index
    %c0_1 = arith.constant 0 : index
    %0 = vector.load %arg2[%c0, %c0_0, %c0_1] : memref<2x8x8xf32, #tpu.memory_space<vmem>>, vector<1x8x8xf32>
    %1 = vector.shape_cast %0 : vector<1x8x8xf32> to vector<8x8xf32>
    %c0_2 = arith.constant 0 : index
    %c0_3 = arith.constant 0 : index
    %c0_4 = arith.constant 0 : index
    %2 = vector.load %arg1[%c0_2, %c0_3, %c0_4] : memref<1x8x20xf32, #tpu.memory_space<vmem>>, vector<1x8x18xf32>
    %3 = vector.shape_cast %2 : vector<1x8x18xf32> to vector<8x18xf32>
    %cst = arith.constant dense<0.000000e+00> : vector<8x18xf32>
    %4 = tpu.matmul %1, %3, %cst {dimension_numbers = #tpu.dot_dimension_numbers<[1], [0], [0], [1], [0, 0, 1, 1], [], []>} : vector<8x8xf32>, vector<8x18xf32>, vector<8x18xf32> -> vector<8x18xf32>
    %c1 = arith.constant 1 : index
    %c0_5 = arith.constant 0 : index
    %c0_6 = arith.constant 0 : index
    %5 = vector.load %arg2[%c1, %c0_5, %c0_6] : memref<2x8x8xf32, #tpu.memory_space<vmem>>, vector<1x8x8xf32>
    %6 = vector.shape_cast %5 : vector<1x8x8xf32> to vector<8x8xf32>
    %c0_7 = arith.constant 0 : index
    %c0_8 = arith.constant 0 : index
    %c2 = arith.constant 2 : index
    %7 = vector.load %arg1[%c0_7, %c0_8, %c2] : memref<1x8x20xf32, #tpu.memory_space<vmem>>, vector<1x8x18xf32>
    %8 = vector.shape_cast %7 : vector<1x8x18xf32> to vector<8x18xf32>
    %cst_9 = arith.constant dense<0.000000e+00> : vector<8x18xf32>
    %9 = tpu.matmul %6, %8, %cst_9 {dimension_numbers = #tpu.dot_dimension_numbers<[1], [0], [0], [1], [0, 0, 1, 1], [], []>} : vector<8x8xf32>, vector<8x18xf32>, vector<8x18xf32> -> vector<8x18xf32>
    %10 = arith.addf %4, %9 : vector<8x18xf32>
    %c0_10 = arith.constant 0 : index
    %c0_11 = arith.constant 0 : index
    %11 = vector.load %arg3[%c0_10, %c0_11] : memref<8x1xf32, #tpu.memory_space<vmem>>, vector<8x1xf32>
    %12 = vector.broadcast %11 : vector<8x1xf32> to vector<8x18xf32>
    %13 = arith.addf %10, %12 : vector<8x18xf32>
    %cst_12 = arith.constant 0.000000e+00 : f32
    %14 = vector.broadcast %cst_12 : f32 to vector<8x18xf32>
    %15 = arith.maximumf %13, %14 : vector<8x18xf32>
    %16 = tpu.iota {dimensions = array<i32: 1>} : vector<8x18xi32>
    %c2_i32 = arith.constant 2 : i32
    %17 = vector.broadcast %c2_i32 : i32 to vector<8x18xi32>
    %18 = arith.cmpi sge, %16, %17 : vector<8x18xi32>
    %cst_13 = arith.constant 0.000000e+00 : f32
    %19 = vector.broadcast %cst_13 : f32 to vector<8x18xf32>
    %20 = arith.select %18, %15, %19 : vector<8x18xi1>, vector<8x18xf32>
    %c0_14 = arith.constant 0 : index
    %c0_15 = arith.constant 0 : index
    %c0_16 = arith.constant 0 : index
    %21 = vector.load %arg4[%c0_14, %c0_15, %c0_16] : memref<2x8x8xf32, #tpu.memory_space<vmem>>, vector<1x8x8xf32>
    %22 = vector.shape_cast %21 : vector<1x8x8xf32> to vector<8x8xf32>
    %23 = vector.extract_strided_slice %20 {offsets = [0, 0], sizes = [8, 16], strides = [1, 1]} : vector<8x18xf32> to vector<8x16xf32>
    %cst_17 = arith.constant dense<0.000000e+00> : vector<8x16xf32>
    %24 = tpu.matmul %22, %23, %cst_17 {dimension_numbers = #tpu.dot_dimension_numbers<[1], [0], [0], [1], [0, 0, 1, 1], [], []>} : vector<8x8xf32>, vector<8x16xf32>, vector<8x16xf32> -> vector<8x16xf32>
    %c1_18 = arith.constant 1 : index
    %c0_19 = arith.constant 0 : index
    %c0_20 = arith.constant 0 : index
    %25 = vector.load %arg4[%c1_18, %c0_19, %c0_20] : memref<2x8x8xf32, #tpu.memory_space<vmem>>, vector<1x8x8xf32>
    %26 = vector.shape_cast %25 : vector<1x8x8xf32> to vector<8x8xf32>
    %27 = vector.extract_strided_slice %20 {offsets = [0, 2], sizes = [8, 16], strides = [1, 1]} : vector<8x18xf32> to vector<8x16xf32>
    %cst_21 = arith.constant dense<0.000000e+00> : vector<8x16xf32>
    %28 = tpu.matmul %26, %27, %cst_21 {dimension_numbers = #tpu.dot_dimension_numbers<[1], [0], [0], [1], [0, 0, 1, 1], [], []>} : vector<8x8xf32>, vector<8x16xf32>, vector<8x16xf32> -> vector<8x16xf32>
    %29 = arith.addf %24, %28 : vector<8x16xf32>
    %c0_22 = arith.constant 0 : index
    %c0_23 = arith.constant 0 : index
    %30 = vector.load %arg5[%c0_22, %c0_23] : memref<8x1xf32, #tpu.memory_space<vmem>>, vector<8x1xf32>
    %31 = vector.broadcast %30 : vector<8x1xf32> to vector<8x16xf32>
    %32 = arith.addf %29, %31 : vector<8x16xf32>
    %cst_24 = arith.constant 0.000000e+00 : f32
    %33 = vector.broadcast %cst_24 : f32 to vector<8x16xf32>
    %34 = arith.maximumf %32, %33 : vector<8x16xf32>
    %c0_25 = arith.constant 0 : index
    %c0_26 = arith.constant 0 : index
    %c4 = arith.constant 4 : index
    %35 = vector.load %arg1[%c0_25, %c0_26, %c4] : memref<1x8x20xf32, #tpu.memory_space<vmem>>, vector<1x8x16xf32>
    %36 = vector.shape_cast %35 : vector<1x8x16xf32> to vector<8x16xf32>
    %37 = arith.addf %34, %36 : vector<8x16xf32>
    %cst_27 = arith.constant 0.000000e+00 : f32
    %38 = vector.broadcast %cst_27 : f32 to vector<8x16xf32>
    %39 = arith.maximumf %37, %38 : vector<8x16xf32>
    %c0_28 = arith.constant 0 : index
    %c0_29 = arith.constant 0 : index
    %c0_30 = arith.constant 0 : index
    %40 = vector.load %arg6[%c0_28, %c0_29, %c0_30] : memref<1x8x16xf32, #tpu.memory_space<vmem>>, vector<1x8x16xf32>
    %41 = vector.shape_cast %40 : vector<1x8x16xf32> to vector<8x16xf32>
    %42 = vector.shape_cast %39 : vector<8x16xf32> to vector<1x8x16xf32>
    tpu.vector_store %arg6[%c0_28, %c0_29, %c0_30], %42 {strides = array<i32>} : memref<1x8x16xf32, #tpu.memory_space<vmem>>, vector<1x8x16xf32>,
    return
  }
  func.func @transform_0(%arg0: i32) -> (i32, i32, i32) {
    %c0_i32 = arith.constant 0 : i32
    %c0_i32_0 = arith.constant 0 : i32
    %c0_i32_1 = arith.constant 0 : i32
    return %arg0, %c0_i32, %c0_i32_0 : i32, i32, i32
  }
  func.func @transform_1(%arg0: i32) -> (i32, i32, i32) {
    %c0_i32 = arith.constant 0 : i32
    %c0_i32_0 = arith.constant 0 : i32
    %c0_i32_1 = arith.constant 0 : i32
    %c0_i32_2 = arith.constant 0 : i32
    return %c0_i32, %c0_i32_0, %c0_i32_1 : i32, i32, i32
  }
  func.func @transform_2(%arg0: i32) -> (i32, i32) {
    %c0_i32 = arith.constant 0 : i32
    %c0_i32_0 = arith.constant 0 : i32
    %c0_i32_1 = arith.constant 0 : i32
    return %c0_i32, %c0_i32_0 : i32, i32
  }
  func.func @transform_3(%arg0: i32) -> (i32, i32, i32) {
    %c0_i32 = arith.constant 0 : i32
    %c0_i32_0 = arith.constant 0 : i32
    %c0_i32_1 = arith.constant 0 : i32
    %c0_i32_2 = arith.constant 0 : i32
    return %c0_i32, %c0_i32_0, %c0_i32_1 : i32, i32, i32
  }
  func.func @transform_4(%arg0: i32) -> (i32, i32) {
    %c0_i32 = arith.constant 0 : i32
    %c0_i32_0 = arith.constant 0 : i32
    %c0_i32_1 = arith.constant 0 : i32
    return %c0_i32, %c0_i32_0 : i32, i32
  }
  func.func @transform_5(%arg0: i32) -> (i32, i32, i32) {
    %c0_i32 = arith.constant 0 : i32
    %c0_i32_0 = arith.constant 0 : i32
    %c0_i32_1 = arith.constant 0 : i32
    return %arg0, %c0_i32, %c0_i32_0 : i32, i32, i32
  }
}

module attributes {stable_mosaic.version = 11 : i64} {
  func.func @_block_kernel(%arg0: i32, %arg1: memref<1x8x24xf32, #tpu.memory_space<vmem>>, %arg2: memref<2x8x8xf32, #tpu.memory_space<vmem>>, %arg3: memref<8x1xf32, #tpu.memory_space<vmem>>, %arg4: memref<2x8x8xf32, #tpu.memory_space<vmem>>, %arg5: memref<8x1xf32, #tpu.memory_space<vmem>>, %arg6: memref<10x8xf32, #tpu.memory_space<vmem>>, %arg7: memref<10x1xf32, #tpu.memory_space<vmem>>, %arg8: memref<1x10x1xf32, #tpu.memory_space<vmem>>) attributes {dimension_semantics = [#tpu.dimension_semantics<parallel>], iteration_bounds = array<i64: 2>, scalar_prefetch = 0 : i64, scratch_operands = 0 : i64, tpu.core_type = #tpu.core_type<tc>, window_params = [{transform_indices = @transform_0, window_bounds = array<i64: 1, 8, 24>}, {pipeline_mode = #tpu.pipeline_mode<synchronous>, transform_indices = @transform_1, window_bounds = array<i64: 2, 8, 8>}, {pipeline_mode = #tpu.pipeline_mode<synchronous>, transform_indices = @transform_2, window_bounds = array<i64: 8, 1>}, {pipeline_mode = #tpu.pipeline_mode<synchronous>, transform_indices = @transform_3, window_bounds = array<i64: 2, 8, 8>}, {pipeline_mode = #tpu.pipeline_mode<synchronous>, transform_indices = @transform_4, window_bounds = array<i64: 8, 1>}, {pipeline_mode = #tpu.pipeline_mode<synchronous>, transform_indices = @transform_5, window_bounds = array<i64: 10, 8>}, {pipeline_mode = #tpu.pipeline_mode<synchronous>, transform_indices = @transform_6, window_bounds = array<i64: 10, 1>}, {transform_indices = @transform_7, window_bounds = array<i64: 1, 10, 1>}]} {
    %c0 = arith.constant 0 : index
    %c0_0 = arith.constant 0 : index
    %c0_1 = arith.constant 0 : index
    %0 = vector.load %arg2[%c0, %c0_0, %c0_1] : memref<2x8x8xf32, #tpu.memory_space<vmem>>, vector<1x8x8xf32>
    %1 = vector.shape_cast %0 : vector<1x8x8xf32> to vector<8x8xf32>
    %c0_2 = arith.constant 0 : index
    %c0_3 = arith.constant 0 : index
    %c0_4 = arith.constant 0 : index
    %2 = vector.load %arg1[%c0_2, %c0_3, %c0_4] : memref<1x8x24xf32, #tpu.memory_space<vmem>>, vector<1x8x20xf32>
    %3 = vector.shape_cast %2 : vector<1x8x20xf32> to vector<8x20xf32>
    %cst = arith.constant dense<0.000000e+00> : vector<8x20xf32>
    %4 = tpu.matmul %1, %3, %cst {dimension_numbers = #tpu.dot_dimension_numbers<[1], [0], [0], [1], [0, 0, 1, 1], [], []>} : vector<8x8xf32>, vector<8x20xf32>, vector<8x20xf32> -> vector<8x20xf32>
    %c1 = arith.constant 1 : index
    %c0_5 = arith.constant 0 : index
    %c0_6 = arith.constant 0 : index
    %5 = vector.load %arg2[%c1, %c0_5, %c0_6] : memref<2x8x8xf32, #tpu.memory_space<vmem>>, vector<1x8x8xf32>
    %6 = vector.shape_cast %5 : vector<1x8x8xf32> to vector<8x8xf32>
    %c0_7 = arith.constant 0 : index
    %c0_8 = arith.constant 0 : index
    %c4 = arith.constant 4 : index
    %7 = vector.load %arg1[%c0_7, %c0_8, %c4] : memref<1x8x24xf32, #tpu.memory_space<vmem>>, vector<1x8x20xf32>
    %8 = vector.shape_cast %7 : vector<1x8x20xf32> to vector<8x20xf32>
    %cst_9 = arith.constant dense<0.000000e+00> : vector<8x20xf32>
    %9 = tpu.matmul %6, %8, %cst_9 {dimension_numbers = #tpu.dot_dimension_numbers<[1], [0], [0], [1], [0, 0, 1, 1], [], []>} : vector<8x8xf32>, vector<8x20xf32>, vector<8x20xf32> -> vector<8x20xf32>
    %10 = arith.addf %4, %9 : vector<8x20xf32>
    %c0_10 = arith.constant 0 : index
    %c0_11 = arith.constant 0 : index
    %11 = vector.load %arg3[%c0_10, %c0_11] : memref<8x1xf32, #tpu.memory_space<vmem>>, vector<8x1xf32>
    %12 = vector.broadcast %11 : vector<8x1xf32> to vector<8x20xf32>
    %13 = arith.addf %10, %12 : vector<8x20xf32>
    %cst_12 = arith.constant 0.000000e+00 : f32
    %14 = vector.broadcast %cst_12 : f32 to vector<8x20xf32>
    %15 = arith.maximumf %13, %14 : vector<8x20xf32>
    %16 = tpu.iota {dimensions = array<i32: 1>} : vector<8x20xi32>
    %c4_i32 = arith.constant 4 : i32
    %17 = vector.broadcast %c4_i32 : i32 to vector<8x20xi32>
    %18 = arith.cmpi sge, %16, %17 : vector<8x20xi32>
    %cst_13 = arith.constant 0.000000e+00 : f32
    %19 = vector.broadcast %cst_13 : f32 to vector<8x20xf32>
    %20 = arith.select %18, %15, %19 : vector<8x20xi1>, vector<8x20xf32>
    %c0_14 = arith.constant 0 : index
    %c0_15 = arith.constant 0 : index
    %c0_16 = arith.constant 0 : index
    %21 = vector.load %arg4[%c0_14, %c0_15, %c0_16] : memref<2x8x8xf32, #tpu.memory_space<vmem>>, vector<1x8x8xf32>
    %22 = vector.shape_cast %21 : vector<1x8x8xf32> to vector<8x8xf32>
    %23 = vector.extract_strided_slice %20 {offsets = [0, 0], sizes = [8, 16], strides = [1, 1]} : vector<8x20xf32> to vector<8x16xf32>
    %cst_17 = arith.constant dense<0.000000e+00> : vector<8x16xf32>
    %24 = tpu.matmul %22, %23, %cst_17 {dimension_numbers = #tpu.dot_dimension_numbers<[1], [0], [0], [1], [0, 0, 1, 1], [], []>} : vector<8x8xf32>, vector<8x16xf32>, vector<8x16xf32> -> vector<8x16xf32>
    %c1_18 = arith.constant 1 : index
    %c0_19 = arith.constant 0 : index
    %c0_20 = arith.constant 0 : index
    %25 = vector.load %arg4[%c1_18, %c0_19, %c0_20] : memref<2x8x8xf32, #tpu.memory_space<vmem>>, vector<1x8x8xf32>
    %26 = vector.shape_cast %25 : vector<1x8x8xf32> to vector<8x8xf32>
    %27 = vector.extract_strided_slice %20 {offsets = [0, 4], sizes = [8, 16], strides = [1, 1]} : vector<8x20xf32> to vector<8x16xf32>
    %cst_21 = arith.constant dense<0.000000e+00> : vector<8x16xf32>
    %28 = tpu.matmul %26, %27, %cst_21 {dimension_numbers = #tpu.dot_dimension_numbers<[1], [0], [0], [1], [0, 0, 1, 1], [], []>} : vector<8x8xf32>, vector<8x16xf32>, vector<8x16xf32> -> vector<8x16xf32>
    %29 = arith.addf %24, %28 : vector<8x16xf32>
    %c0_22 = arith.constant 0 : index
    %c0_23 = arith.constant 0 : index
    %30 = vector.load %arg5[%c0_22, %c0_23] : memref<8x1xf32, #tpu.memory_space<vmem>>, vector<8x1xf32>
    %31 = vector.broadcast %30 : vector<8x1xf32> to vector<8x16xf32>
    %32 = arith.addf %29, %31 : vector<8x16xf32>
    %cst_24 = arith.constant 0.000000e+00 : f32
    %33 = vector.broadcast %cst_24 : f32 to vector<8x16xf32>
    %34 = arith.maximumf %32, %33 : vector<8x16xf32>
    %c0_25 = arith.constant 0 : index
    %c0_26 = arith.constant 0 : index
    %c8 = arith.constant 8 : index
    %35 = vector.load %arg1[%c0_25, %c0_26, %c8] : memref<1x8x24xf32, #tpu.memory_space<vmem>>, vector<1x8x16xf32>
    %36 = vector.shape_cast %35 : vector<1x8x16xf32> to vector<8x16xf32>
    %37 = arith.addf %34, %36 : vector<8x16xf32>
    %cst_27 = arith.constant 0.000000e+00 : f32
    %38 = vector.broadcast %cst_27 : f32 to vector<8x16xf32>
    %39 = arith.maximumf %37, %38 : vector<8x16xf32>
    %40 = vector.extract_strided_slice %39 {offsets = [0, 15], sizes = [8, 1], strides = [1, 1]} : vector<8x16xf32> to vector<8x1xf32>
    %c0_28 = arith.constant 0 : index
    %c0_29 = arith.constant 0 : index
    %41 = vector.load %arg6[%c0_28, %c0_29] : memref<10x8xf32, #tpu.memory_space<vmem>>, vector<10x8xf32>
    %cst_30 = arith.constant dense<0.000000e+00> : vector<10x1xf32>
    %42 = tpu.matmul %41, %40, %cst_30 {dimension_numbers = #tpu.dot_dimension_numbers<[1], [0], [0], [1], [0, 0, 1, 1], [], []>} : vector<10x8xf32>, vector<8x1xf32>, vector<10x1xf32> -> vector<10x1xf32>
    %c0_31 = arith.constant 0 : index
    %c0_32 = arith.constant 0 : index
    %43 = vector.load %arg7[%c0_31, %c0_32] : memref<10x1xf32, #tpu.memory_space<vmem>>, vector<10x1xf32>
    %44 = arith.addf %42, %43 : vector<10x1xf32>
    %cst_33 = arith.constant dense<0xFF800000> : vector<1xf32>
    %45 = vector.multi_reduction <maximumf>, %44, %cst_33 [0] : vector<10x1xf32> to vector<1xf32>
    %46 = vector.shape_cast %45 : vector<1xf32> to vector<1x1xf32>
    %47 = vector.broadcast %46 : vector<1x1xf32> to vector<10x1xf32>
    %48 = arith.subf %44, %47 : vector<10x1xf32>
    %49 = math.exp %48 : vector<10x1xf32>
    %cst_34 = arith.constant dense<0.000000e+00> : vector<1xf32>
    %50 = vector.multi_reduction <add>, %49, %cst_34 [0] : vector<10x1xf32> to vector<1xf32>
    %51 = vector.shape_cast %50 : vector<1xf32> to vector<1x1xf32>
    %52 = math.log %51 : vector<1x1xf32>
    %53 = vector.broadcast %52 : vector<1x1xf32> to vector<10x1xf32>
    %54 = arith.subf %48, %53 : vector<10x1xf32>
    %c0_35 = arith.constant 0 : index
    %c0_36 = arith.constant 0 : index
    %c0_37 = arith.constant 0 : index
    %55 = vector.load %arg8[%c0_35, %c0_36, %c0_37] : memref<1x10x1xf32, #tpu.memory_space<vmem>>, vector<1x10x1xf32>
    %56 = vector.shape_cast %55 : vector<1x10x1xf32> to vector<10x1xf32>
    %57 = vector.shape_cast %54 : vector<10x1xf32> to vector<1x10x1xf32>
    tpu.vector_store %arg8[%c0_35, %c0_36, %c0_37], %57 {strides = array<i32>} : memref<1x10x1xf32, #tpu.memory_space<vmem>>, vector<1x10x1xf32>,
    return
  }
  func.func @transform_0(%arg0: i32) -> (i32, i32, i32) {
    %c0_i32 = arith.constant 0 : i32
    %c0_i32_0 = arith.constant 0 : i32
    %c0_i32_1 = arith.constant 0 : i32
    return %arg0, %c0_i32, %c0_i32_0 : i32, i32, i32
  }
  func.func @transform_1(%arg0: i32) -> (i32, i32, i32) {
    %c0_i32 = arith.constant 0 : i32
    %c0_i32_0 = arith.constant 0 : i32
    %c0_i32_1 = arith.constant 0 : i32
    %c0_i32_2 = arith.constant 0 : i32
    return %c0_i32, %c0_i32_0, %c0_i32_1 : i32, i32, i32
  }
  func.func @transform_2(%arg0: i32) -> (i32, i32) {
    %c0_i32 = arith.constant 0 : i32
    %c0_i32_0 = arith.constant 0 : i32
    %c0_i32_1 = arith.constant 0 : i32
    return %c0_i32, %c0_i32_0 : i32, i32
  }
  func.func @transform_3(%arg0: i32) -> (i32, i32, i32) {
    %c0_i32 = arith.constant 0 : i32
    %c0_i32_0 = arith.constant 0 : i32
    %c0_i32_1 = arith.constant 0 : i32
    %c0_i32_2 = arith.constant 0 : i32
    return %c0_i32, %c0_i32_0, %c0_i32_1 : i32, i32, i32
  }
  func.func @transform_4(%arg0: i32) -> (i32, i32) {
    %c0_i32 = arith.constant 0 : i32
    %c0_i32_0 = arith.constant 0 : i32
    %c0_i32_1 = arith.constant 0 : i32
    return %c0_i32, %c0_i32_0 : i32, i32
  }
  func.func @transform_5(%arg0: i32) -> (i32, i32) {
    %c0_i32 = arith.constant 0 : i32
    %c0_i32_0 = arith.constant 0 : i32
    %c0_i32_1 = arith.constant 0 : i32
    return %c0_i32, %c0_i32_0 : i32, i32
  }
  func.func @transform_6(%arg0: i32) -> (i32, i32) {
    %c0_i32 = arith.constant 0 : i32
    %c0_i32_0 = arith.constant 0 : i32
    %c0_i32_1 = arith.constant 0 : i32
    return %c0_i32, %c0_i32_0 : i32, i32
  }
  func.func @transform_7(%arg0: i32) -> (i32, i32, i32) {
    %c0_i32 = arith.constant 0 : i32
    %c0_i32_0 = arith.constant 0 : i32
    %c0_i32_1 = arith.constant 0 : i32
    return %arg0, %c0_i32, %c0_i32_0 : i32, i32, i32
  }
}

</mosaic_0001>

<llo_original>
// kernel: tcn_forward.3
$region0: #{tcn_forward.3}
  #allocation0 [shape = 'u32[]', space=smem, size = 0x4, offset = 0x4, fixed_abs, tag = 'smem constant byte address 0x4 - core index']
  #allocation1 [shape = 'u32[72,128]{1,0:T(1,128)}', space=vmem, size = 0x9000, scoped, tag = 'internal scratch']
  %s0 = inlined_call_operand.vmem [shape: f32[2,4,18], index: 0, kind: input, shape index: {}]
  %s1 = inlined_call_operand.vmem [shape: f32[2,8,4], index: 1, kind: input, shape index: {}]
  %s2 = inlined_call_operand.vmem [shape: f32[8,1], index: 2, kind: input, shape index: {}]
  %s3 = inlined_call_operand.vmem [shape: f32[2,8,8], index: 3, kind: input, shape index: {}]
  %s4 = inlined_call_operand.vmem [shape: f32[8,1], index: 4, kind: input, shape index: {}]
  %s5 = inlined_call_operand.vmem [shape: f32[8,4], index: 5, kind: input, shape index: {}]
  %s6 = inlined_call_operand.vmem [shape: f32[8,1], index: 6, kind: input, shape index: {}]
  %s7 = inlined_call_operand.vmem [shape: f32[2,8,16], index: 7, kind: output, shape index: {}]
  %s8 = sld [smem:[#allocation0]]
  $region61: #{tcn_forward.3} parent=0
    _
  %s10 = ssub.s32 1, %s8
  %s11 = scalar_select 0, %s10, %s8
  loop: start=0, step=1, limit=4
  $region2: #{tcn_forward.3} parent=0 // loop_pre_header
    _
  $region3: #{tcn_forward.3} parent=0 // loop_header
    %s13 = sphi 0, %s17
    %p14 = scmp.ge.s32.totalorder %s13, 4
    %s23 = sphi 0, %s25
    %s26 = sphi 0, %s23
    %s27 = sphi 0, %s26
    %s43 = sphi 0, %s27
    %s47 = sphi 0, %s47
    %s49 = sphi 0, %s47
    %s50 = sphi 0, %s49
    %s64 = sphi 0, %s50
    %s68 = sphi 0, %s68
    %s70 = sphi 0, %s68
    %s71 = sphi 0, %s70
    %s85 = sphi 0, %s71
    %s89 = sphi 0, %s89
    %s91 = sphi 0, %s89
    %s92 = sphi 0, %s91
    %s106 = sphi 0, %s92
    %s110 = sphi 0, %s110
    %s112 = sphi 0, %s110
    %s113 = sphi 0, %s112
    %s127 = sphi 0, %s113
    %s131 = sphi 0, %s131
    %s133 = sphi 0, %s131
    %s134 = sphi 0, %s133
    %s148 = sphi 0, %s134
    %s152 = sphi 0, %s152
    %s154 = sphi 0, %s152
    %s155 = sphi 0, %s154
    %s169 = sphi 0, %s155
    %s175 = sphi 0, %s177
    %s178 = sphi 0, %s175
    %s179 = sphi 0, %s178
    %s195 = sphi 0, %s179
  $region4: #{tcn_forward.3} parent=0 // loop_header_branch
    %16 = sbr.rel (%p14) target = $region8
  $region5: #{tcn_forward.3} parent=0 // loop_body
    %s18 = ssub.s32 %s13, 1
    %s19 = ssub.s32 %s13, 2
    %s20 = sadd.s32 %s13, 1
    %s21 = ssub.s32 %s13, %s20
    %p22 = scmp.eq.s32.totalorder %s21, 0
    %s24 = sadd.s32 %s23, 1
    %s25 = scalar_select %p22, %s23, %s24
    %p28 = pneg %p22
    %p29 = scmp.eq.s32.totalorder %s13, 1
    %p30 = por %p28, %p29
    %p31 = scmp.ne.s32.totalorder %s23, %s26
    %p32 = scmp.eq.s32.totalorder %s13, 0
    %p33 = por %p31, %p32
    %p34 = scmp.ne.s32.totalorder %s23, %s26
    %p35 = scmp.eq.s32.totalorder %s18, 1
    %p36 = por %p34, %p35
    %p37 = scmp.ne.s32.totalorder %s26, %s27
    %p38 = scmp.eq.s32.totalorder %s18, 0
    %p39 = por %p37, %p38
    %p40 = scmp.ne.s32.totalorder %s26, %s27
    %p41 = scmp.eq.s32.totalorder %s19, 1
    %p42 = por %p40, %p41
    %p44 = scmp.ne.s32.totalorder %s27, %s43
    %p45 = scmp.eq.s32.totalorder %s19, 0
    %p46 = por %p44, %p45
    %s48 = sadd.s32 %s47, 1
    %p51 = scmp.eq.s32.totalorder %s13, 1
    %p52 = scmp.ne.s32.totalorder %s47, %s49
    %p53 = scmp.eq.s32.totalorder %s13, 0
    %p54 = por %p52, %p53
    %p55 = scmp.ne.s32.totalorder %s47, %s49
    %p56 = scmp.eq.s32.totalorder %s18, 1
    %p57 = por %p55, %p56
    %p58 = scmp.ne.s32.totalorder %s49, %s50
    %p59 = scmp.eq.s32.totalorder %s18, 0
    %p60 = por %p58, %p59
    %p61 = scmp.ne.s32.totalorder %s49, %s50
    %p62 = scmp.eq.s32.totalorder %s19, 1
    %p63 = por %p61, %p62
    %p65 = scmp.ne.s32.totalorder %s50, %s64
    %p66 = scmp.eq.s32.totalorder %s19, 0
    %p67 = por %p65, %p66
    %s69 = sadd.s32 %s68, 1
    %p72 = scmp.eq.s32.totalorder %s13, 1
    %p73 = scmp.ne.s32.totalorder %s68, %s70
    %p74 = scmp.eq.s32.totalorder %s13, 0
    %p75 = por %p73, %p74
    %p76 = scmp.ne.s32.totalorder %s68, %s70
    %p77 = scmp.eq.s32.totalorder %s18, 1
    %p78 = por %p76, %p77
    %p79 = scmp.ne.s32.totalorder %s70, %s71
    %p80 = scmp.eq.s32.totalorder %s18, 0
    %p81 = por %p79, %p80
    %p82 = scmp.ne.s32.totalorder %s70, %s71
    %p83 = scmp.eq.s32.totalorder %s19, 1
    %p84 = por %p82, %p83
    %p86 = scmp.ne.s32.totalorder %s71, %s85
    %p87 = scmp.eq.s32.totalorder %s19, 0
    %p88 = por %p86, %p87
    %s90 = sadd.s32 %s89, 1
    %p93 = scmp.eq.s32.totalorder %s13, 1
    %p94 = scmp.ne.s32.totalorder %s89, %s91
    %p95 = scmp.eq.s32.totalorder %s13, 0
    %p96 = por %p94, %p95
    %p97 = scmp.ne.s32.totalorder %s89, %s91
    %p98 = scmp.eq.s32.totalorder %s18, 1
    %p99 = por %p97, %p98
    %p100 = scmp.ne.s32.totalorder %s91, %s92
    %p101 = scmp.eq.s32.totalorder %s18, 0
    %p102 = por %p100, %p101
    %p103 = scmp.ne.s32.totalorder %s91, %s92
    %p104 = scmp.eq.s32.totalorder %s19, 1
    %p105 = por %p103, %p104
    %p107 = scmp.ne.s32.totalorder %s92, %s106
    %p108 = scmp.eq.s32.totalorder %s19, 0
    %p109 = por %p107, %p108
    %s111 = sadd.s32 %s110, 1
    %p114 = scmp.eq.s32.totalorder %s13, 1
    %p115 = scmp.ne.s32.totalorder %s110, %s112
    %p116 = scmp.eq.s32.totalorder %s13, 0
    %p117 = por %p115, %p116
    %p118 = scmp.ne.s32.totalorder %s110, %s112
    %p119 = scmp.eq.s32.totalorder %s18, 1
    %p120 = por %p118, %p119
    %p121 = scmp.ne.s32.totalorder %s112, %s113
    %p122 = scmp.eq.s32.totalorder %s18, 0
    %p123 = por %p121, %p122
    %p124 = scmp.ne.s32.totalorder %s112, %s113
    %p125 = scmp.eq.s32.totalorder %s19, 1
    %p126 = por %p124, %p125
    %p128 = scmp.ne.s32.totalorder %s113, %s127
    %p129 = scmp.eq.s32.totalorder %s19, 0
    %p130 = por %p128, %p129
    %s132 = sadd.s32 %s131, 1
    %p135 = scmp.eq.s32.totalorder %s13, 1
    %p136 = scmp.ne.s32.totalorder %s131, %s133
    %p137 = scmp.eq.s32.totalorder %s13, 0
    %p138 = por %p136, %p137
    %p139 = scmp.ne.s32.totalorder %s131, %s133
    %p140 = scmp.eq.s32.totalorder %s18, 1
    %p141 = por %p139, %p140
    %p142 = scmp.ne.s32.totalorder %s133, %s134
    %p143 = scmp.eq.s32.totalorder %s18, 0
    %p144 = por %p142, %p143
    %p145 = scmp.ne.s32.totalorder %s133, %s134
    %p146 = scmp.eq.s32.totalorder %s19, 1
    %p147 = por %p145, %p146
    %p149 = scmp.ne.s32.totalorder %s134, %s148
    %p150 = scmp.eq.s32.totalorder %s19, 0
    %p151 = por %p149, %p150
    %s153 = sadd.s32 %s152, 1
    %p156 = scmp.eq.s32.totalorder %s13, 1
    %p157 = scmp.ne.s32.totalorder %s152, %s154
    %p158 = scmp.eq.s32.totalorder %s13, 0
    %p159 = por %p157, %p158
    %p160 = scmp.ne.s32.totalorder %s152, %s154
    %p161 = scmp.eq.s32.totalorder %s18, 1
    %p162 = por %p160, %p161
    %p163 = scmp.ne.s32.totalorder %s154, %s155
    %p164 = scmp.eq.s32.totalorder %s18, 0
    %p165 = por %p163, %p164
    %p166 = scmp.ne.s32.totalorder %s154, %s155
    %p167 = scmp.eq.s32.totalorder %s19, 1
    %p168 = por %p166, %p167
    %p170 = scmp.ne.s32.totalorder %s155, %s169
    %p171 = scmp.eq.s32.totalorder %s19, 0
    %p172 = por %p170, %p171
    %s173 = ssub.s32 %s13, %s20
    %p174 = scmp.eq.s32.totalorder %s173, 0
    %s176 = sadd.s32 %s175, 1
    %s177 = scalar_select %p174, %s175, %s176
    %p180 = pneg %p174
    %p181 = scmp.eq.s32.totalorder %s13, 1
    %p182 = por %p180, %p181
    %p183 = scmp.ne.s32.totalorder %s175, %s178
    %p184 = scmp.eq.s32.totalorder %s13, 0
    %p185 = por %p183, %p184
    %p186 = scmp.ne.s32.totalorder %s175, %s178
    %p187 = scmp.eq.s32.totalorder %s18, 1
    %p188 = por %p186, %p187
    %p189 = scmp.ne.s32.totalorder %s178, %s179
    %p190 = scmp.eq.s32.totalorder %s18, 0
    %p191 = por %p189, %p190
    %p192 = scmp.ne.s32.totalorder %s178, %s179
    %p193 = scmp.eq.s32.totalorder %s19, 1
    %p194 = por %p192, %p193
    %p196 = scmp.ne.s32.totalorder %s179, %s195
    %p197 = scmp.eq.s32.totalorder %s19, 0
    %p198 = por %p196, %p197
    %p199 = scmp.le.s32.totalorder 1, %s13
    %p200 = scmp.lt.s32.totalorder %s13, 3
    %p201 = pnand %p199, %p200
    %p202 = pneg %p201
    // Predicated region
    $region9: #{tcn_forward.3} parent=5 // pred_check
      _
    $region10: #{tcn_forward.3} parent=5 // pred_check_branch
      %204 = sbr.rel (%p201) target = $region12
    $region11: #{tcn_forward.3} parent=5 // pred_region
      %s205 = ssub.s32 %s13, 1
      // Predicated region
      $region13: #{tcn_forward.3} parent=11 // pred_check
        %p206 = pneg %p60
      $region14: #{tcn_forward.3} parent=11 // pred_check_branch
        %208 = sbr.rel (%p206) target = $region16
      $region15: #{tcn_forward.3} parent=11 // pred_region
        _
      $region16: #{tcn_forward.3} parent=11 // pred_fallthru
        _
      // Predicated region
      $region17: #{tcn_forward.3} parent=11 // pred_check
        %p209 = pneg %p81
      $region18: #{tcn_forward.3} parent=11 // pred_check_branch
        %211 = sbr.rel (%p209) target = $region20
      $region19: #{tcn_forward.3} parent=11 // pred_region
        _
      $region20: #{tcn_forward.3} parent=11 // pred_fallthru
        _
      // Predicated region
      $region21: #{tcn_forward.3} parent=11 // pred_check
        %p212 = pneg %p102
      $region22: #{tcn_forward.3} parent=11 // pred_check_branch
        %214 = sbr.rel (%p212) target = $region24
      $region23: #{tcn_forward.3} parent=11 // pred_region
        _
      $region24: #{tcn_forward.3} parent=11 // pred_fallthru
        _
      // Predicated region
      $region25: #{tcn_forward.3} parent=11 // pred_check
        %p215 = pneg %p123
      $region26: #{tcn_forward.3} parent=11 // pred_check_branch
        %217 = sbr.rel (%p215) target = $region28
      $region27: #{tcn_forward.3} parent=11 // pred_region
        _
      $region28: #{tcn_forward.3} parent=11 // pred_fallthru
        _
      // Predicated region
      $region29: #{tcn_forward.3} parent=11 // pred_check
        %p218 = pneg %p144
      $region30: #{tcn_forward.3} parent=11 // pred_check_branch
        %220 = sbr.rel (%p218) target = $region32
      $region31: #{tcn_forward.3} parent=11 // pred_region
        _
      $region32: #{tcn_forward.3} parent=11 // pred_fallthru
        _
      // Predicated region
      $region33: #{tcn_forward.3} parent=11 // pred_check
        %p221 = pneg %p165
      $region34: #{tcn_forward.3} parent=11 // pred_check_branch
        %223 = sbr.rel (%p221) target = $region36
      $region35: #{tcn_forward.3} parent=11 // pred_region
        _
      $region36: #{tcn_forward.3} parent=11 // pred_fallthru
        _
    $region12: #{tcn_forward.3} parent=5 // pred_fallthru
      _
    %p224 = scmp.lt.s32.totalorder %s13, 2
    // Predicated region
    $region37: #{tcn_forward.3} parent=5 // pred_check
      %p225 = pneg %p224
    $region38: #{tcn_forward.3} parent=5 // pred_check_branch
      %227 = sbr.rel (%p225) target = $region40
    $region39: #{tcn_forward.3} parent=5 // pred_region
      // Predicated region
      $region41: #{tcn_forward.3} parent=39 // pred_check
        %p228 = pneg %p33
      $region42: #{tcn_forward.3} parent=39 // pred_check_branch
        %230 = sbr.rel (%p228) target = $region44
      $region43: #{tcn_forward.3} parent=39 // pred_region
        %p231 = scmp.lt.s32.totalorder %s13, 1
        %s232 = scalar_select %p231, %s13, 1
        %s233 = smul.addr %s232, 4
        %s234 = scalar_lea.vmem %s0, %s233
      $region44: #{tcn_forward.3} parent=39 // pred_fallthru
        _
    $region40: #{tcn_forward.3} parent=5 // pred_fallthru
      _
    %p235 = scmp.le.s32.totalorder 1, %s13
    %p236 = scmp.lt.s32.totalorder %s13, 3
    %p237 = pnand %p235, %p236
    %p238 = pneg %p237
    // Predicated region
    $region45: #{tcn_forward.3} parent=5 // pred_check
      _
    $region46: #{tcn_forward.3} parent=5 // pred_check_branch
      %240 = sbr.rel (%p237) target = $region48
    $region47: #{tcn_forward.3} parent=5 // pred_region
      %s241 = ssub.s32 %s13, 1
      %p242 = scmp.lt.s32.totalorder %s18, 1
      %s243 = scalar_select %p242, %s18, 1
      %s244 = smul.addr %s243, 4
      %s245 = scalar_lea.vmem %s0, %s244
      %p246 = pneg %p39
      %p247 = pneg %p36
      %p248 = pneg %p60
      %p249 = pneg %p57
      %p250 = pneg %p81
      %p251 = pneg %p78
      %p252 = pneg %p102
      %p253 = pneg %p99
      %p254 = pneg %p123
      %p255 = pneg %p120
      %p256 = pneg %p144
      %p257 = pneg %p141
      %p258 = pneg %p165
      %p259 = pneg %p162
      %p260 = pneg %p191
      %p261 = pneg %p188
      %p262 = scmp.lt.s32.totalorder %s18, 1
      %s263 = scalar_select %p262, %s18, 1
      %s264 = smul.addr %s263, 8
      %s265 = scalar_lea.vmem %s7, %s264
      %p266 = scmp.lt.s32.totalorder %s18, 1
      %s267 = scalar_select %p266, %s18, 1
      %s268 = smul.addr %s267, 4
      %s269 = scalar_lea.vmem %s0, %s268
      %p270 = scmp.lt.s32.totalorder %s18, 1
      %s271 = scalar_select %p270, %s18, 1
      %s272 = smul.addr %s271, 8
      %s273 = scalar_lea.vmem %s7, %s272
      %v274 = vld [vmem:[%s1] sm:$0xff]
      %v275 = vld [vmem:[%s269] sm:$0xf]
      %s276 = scalar_lea.vmem %s1, 8
      %v277 = vld [vmem:[%s276] sm:$0xff]
      %279 = vrot.lane.b32.xlu0 %v275, 127
      %v280 = vpop.permute.xlu0 %279
      %vm281 = vcmask 31744
      %v283 = vsel %vm281, %v277, 0
      %vm285 = vcmask 1043456
      %v286 = vsel %vm285, %v280, 0
      %288 = vmatpush.msra.mxu0 0.0
      %289 = vmatpush.msra.mxu0 0.0
      %290 = vmatpush.msra.mxu0 0.0
      %291 = vmatpush.msra.mxu0 0.0
      %292 = vmatpush.msra.mxu0 0.0
      %293 = vmatpush.msra.mxu0 0.0
      %294 = vmatpush.msra.mxu0 0.0
      %295 = vmatpush.msra.mxu0 0.0
      %296 = vmatpush.msra.mxu0 0.0
      %297 = vmatpush.msra.mxu0 0.0
      %298 = vmatpush.msra.mxu0 0.0
      %299 = vmatpush.msra.mxu0 0.0
      %300 = vmatpush.msra.mxu0 0.0
      %301 = vmatpush.msra.mxu0 0.0
      %302 = vmatpush.msra.mxu0 0.0
      %303 = vmatpush.msra.mxu0 %v286
      %304 = vmatmul.f32.gmra.mxu0 %v283
      %v305 = vpop.f32.mrf.mxu0
      %v306 = vadd.f32 0.0, %v305
      %307 = vdwg.mxu0
      %v309 = vsel %vm281, %v274, 0
      %v311 = vsel %vm285, %v275, 0
      %313 = vmatpush.msra.mxu0 0.0
      %314 = vmatpush.msra.mxu0 0.0
      %315 = vmatpush.msra.mxu0 0.0
      %316 = vmatpush.msra.mxu0 0.0
      %317 = vmatpush.msra.mxu0 0.0
      %318 = vmatpush.msra.mxu0 0.0
      %319 = vmatpush.msra.mxu0 0.0
      %320 = vmatpush.msra.mxu0 0.0
      %321 = vmatpush.msra.mxu0 0.0
      %322 = vmatpush.msra.mxu0 0.0
      %323 = vmatpush.msra.mxu0 0.0
      %324 = vmatpush.msra.mxu0 0.0
      %325 = vmatpush.msra.mxu0 0.0
      %326 = vmatpush.msra.mxu0 0.0
      %327 = vmatpush.msra.mxu0 0.0
      %328 = vmatpush.msra.mxu0 %v311
      %329 = vmatmul.f32.gmra.mxu0 %v309
      %v330 = vpop.f32.mrf.mxu0
      %v331 = vadd.f32 %v306, %v330
      %332 = vdwg.mxu0
      %v333 = vld [vmem:[%s2] sm:$0xff]
      %335 = vset.pattern.permute.xlu0 0
      %336 = vperm.xlu0 %335, %v333
      %v337 = vpop.permute.xlu0 %336
      %v339 = vadd.f32 %v331, %v337
      %v340 = vmax.f32 %v339, 0.0
      %v341 = vlaneseq
      %v342 = vand.u32 %v341, 127
      %vm343 = vcmp.ge.s32.totalorder %v342, 1
      %v344 = vsel %vm343, %v340, 0.0
      %v345 = vld [vmem:[%s3] sm:$0xff]
      %s346 = scalar_lea.vmem %s3, 8
      %v347 = vld [vmem:[%s346] sm:$0xff]
      %349 = vrot.lane.b32.xlu0 %v344, 127
      %v350 = vpop.permute.xlu0 %349
      %vm352 = vcmask 64512
      %v354 = vsel %vm352, %v347, 0
      %356 = vmatpush.msra.mxu0 0.0
      %357 = vmatpush.msra.mxu0 0.0
      %358 = vmatpush.msra.mxu0 0.0
      %359 = vmatpush.msra.mxu0 0.0
      %360 = vmatpush.msra.mxu0 0.0
      %361 = vmatpush.msra.mxu0 0.0
      %362 = vmatpush.msra.mxu0 0.0
      %363 = vmatpush.msra.mxu0 0.0
      %364 = vmatpush.msra.mxu0 0.0
      %365 = vmatpush.msra.mxu0 0.0
      %366 = vmatpush.msra.mxu0 0.0
      %367 = vmatpush.msra.mxu0 0.0
      %368 = vmatpush.msra.mxu0 0.0
      %369 = vmatpush.msra.mxu0 0.0
      %370 = vmatpush.msra.mxu0 0.0
      %371 = vmatpush.msra.mxu0 %v350
      %372 = vmatmul.f32.gmra.mxu0 %v354
      %v373 = vpop.f32.mrf.mxu0
      %v374 = vadd.f32 0.0, %v373
      %375 = vdwg.mxu0
      %v377 = vsel %vm352, %v345, 0
      %379 = vmatpush.msra.mxu0 0.0
      %380 = vmatpush.msra.mxu0 0.0
      %381 = vmatpush.msra.mxu0 0.0
      %382 = vmatpush.msra.mxu0 0.0
      %383 = vmatpush.msra.mxu0 0.0
      %384 = vmatpush.msra.mxu0 0.0
      %385 = vmatpush.msra.mxu0 0.0
      %386 = vmatpush.msra.mxu0 0.0
      %387 = vmatpush.msra.mxu0 0.0
      %388 = vmatpush.msra.mxu0 0.0
      %389 = vmatpush.msra.mxu0 0.0
      %390 = vmatpush.msra.mxu0 0.0
      %391 = vmatpush.msra.mxu0 0.0
      %392 = vmatpush.msra.mxu0 0.0
      %393 = vmatpush.msra.mxu0 0.0
      %394 = vmatpush.msra.mxu0 %v344
      %395 = vmatmul.f32.gmra.mxu0 %v377
      %v396 = vpop.f32.mrf.mxu0
      %v397 = vadd.f32 %v374, %v396
      %398 = vdwg.mxu0
      %v399 = vld [vmem:[%s4] sm:$0xff]
      %401 = vset.pattern.permute.xlu0 0
      %402 = vperm.xlu0 %401, %v399
      %v403 = vpop.permute.xlu0 %402
      %v405 = vadd.f32 %v397, %v403
      %v406 = vmax.f32 %v405, 0.0
      %v407 = vld [vmem:[%s5] sm:$0xff]
      %v408 = vld [vmem:[%s6] sm:$0xff]
      %410 = vset.pattern.permute.xlu0 0
      %411 = vperm.xlu0 %410, %v408
      %v412 = vpop.permute.xlu0 %411
      %414 = vrot.lane.b32.xlu0 %v275, 126
      %v415 = vpop.permute.xlu0 %414
      %v417 = vsel %vm281, %v407, 0
      %v419 = vsel %vm285, %v415, 0
      %421 = vmatpush.msra.mxu0 0.0
      %422 = vmatpush.msra.mxu0 0.0
      %423 = vmatpush.msra.mxu0 0.0
      %424 = vmatpush.msra.mxu0 0.0
      %425 = vmatpush.msra.mxu0 0.0
      %426 = vmatpush.msra.mxu0 0.0
      %427 = vmatpush.msra.mxu0 0.0
      %428 = vmatpush.msra.mxu0 0.0
      %429 = vmatpush.msra.mxu0 0.0
      %430 = vmatpush.msra.mxu0 0.0
      %431 = vmatpush.msra.mxu0 0.0
      %432 = vmatpush.msra.mxu0 0.0
      %433 = vmatpush.msra.mxu0 0.0
      %434 = vmatpush.msra.mxu0 0.0
      %435 = vmatpush.msra.mxu0 0.0
      %436 = vmatpush.msra.mxu0 %v419
      %437 = vmatmul.f32.gmra.mxu0 %v417
      %v438 = vpop.f32.mrf.mxu0
      %v439 = vadd.f32 %v412, %v438
      %440 = vdwg.mxu0
      %v441 = vadd.f32 %v406, %v439
      %v442 = vmax.f32 %v441, 0.0
      %vm443 = vcmask 130048
      %444 = vst.msk [vmem:[%s273] sm:$0xff] %vm443, %v442
      %p445 = scmp.lt.s32.totalorder %s18, 1
      %s446 = scalar_select %p445, %s18, 1
      %s447 = smul.addr %s446, 8
      %s448 = scalar_lea.vmem %s7, %s447
      // Predicated region
      $region49: #{tcn_forward.3} parent=47 // pred_check
        %p449 = pneg %p188
      $region50: #{tcn_forward.3} parent=47 // pred_check_branch
        %451 = sbr.rel (%p449) target = $region52
      $region51: #{tcn_forward.3} parent=47 // pred_region
        _
      $region52: #{tcn_forward.3} parent=47 // pred_fallthru
        _
    $region48: #{tcn_forward.3} parent=5 // pred_fallthru
      _
    %p452 = scmp.le.s32.totalorder 2, %s13
    // Predicated region
    $region53: #{tcn_forward.3} parent=5 // pred_check
      %p453 = pneg %p452
    $region54: #{tcn_forward.3} parent=5 // pred_check_branch
      %455 = sbr.rel (%p453) target = $region56
    $region55: #{tcn_forward.3} parent=5 // pred_region
      %s456 = ssub.s32 %s13, 2
      // Predicated region
      $region57: #{tcn_forward.3} parent=55 // pred_check
        %p457 = pneg %p194
      $region58: #{tcn_forward.3} parent=55 // pred_check_branch
        %459 = sbr.rel (%p457) target = $region60
      $region59: #{tcn_forward.3} parent=55 // pred_region
        %p460 = scmp.lt.s32.totalorder %s19, 1
        %s461 = scalar_select %p460, %s19, 1
        %s462 = smul.addr %s461, 8
        %s463 = scalar_lea.vmem %s7, %s462
      $region60: #{tcn_forward.3} parent=55 // pred_fallthru
        _
    $region56: #{tcn_forward.3} parent=5 // pred_fallthru
      _
  $region6: #{tcn_forward.3} parent=0 // loop_footer
    %s17 = sadd.s32 1, %s13
  $region7: #{tcn_forward.3} parent=0 // loop_footer_branch
    %12 = sbr.rel target = $region3
  $region8: #{tcn_forward.3} parent=0 // loop_exit
    _

// kernel: tcn_forward.4
$region0: #{tcn_forward.4}
  #allocation0 [shape = 'u32[]', space=smem, size = 0x4, offset = 0x4, fixed_abs, tag = 'smem constant byte address 0x4 - core index']
  #allocation1 [shape = 'u32[72,128]{1,0:T(1,128)}', space=vmem, size = 0x9000, scoped, tag = 'internal scratch']
  %s0 = inlined_call_operand.vmem [shape: f32[2,8,20], index: 0, kind: input, shape index: {}]
  %s1 = inlined_call_operand.vmem [shape: f32[2,8,8], index: 1, kind: input, shape index: {}]
  %s2 = inlined_call_operand.vmem [shape: f32[8,1], index: 2, kind: input, shape index: {}]
  %s3 = inlined_call_operand.vmem [shape: f32[2,8,8], index: 3, kind: input, shape index: {}]
  %s4 = inlined_call_operand.vmem [shape: f32[8,1], index: 4, kind: input, shape index: {}]
  %s5 = inlined_call_operand.vmem [shape: f32[2,8,16], index: 5, kind: output, shape index: {}]
  %s6 = sld [smem:[#allocation0]]
  $region53: #{tcn_forward.4} parent=0
    _
  %s8 = ssub.s32 1, %s6
  %s9 = scalar_select 0, %s8, %s6
  loop: start=0, step=1, limit=4
  $region2: #{tcn_forward.4} parent=0 // loop_pre_header
    _
  $region3: #{tcn_forward.4} parent=0 // loop_header
    %s11 = sphi 0, %s15
    %p12 = scmp.ge.s32.totalorder %s11, 4
    %s21 = sphi 0, %s23
    %s24 = sphi 0, %s21
    %s25 = sphi 0, %s24
    %s41 = sphi 0, %s25
    %s45 = sphi 0, %s45
    %s47 = sphi 0, %s45
    %s48 = sphi 0, %s47
    %s62 = sphi 0, %s48
    %s66 = sphi 0, %s66
    %s68 = sphi 0, %s66
    %s69 = sphi 0, %s68
    %s83 = sphi 0, %s69
    %s87 = sphi 0, %s87
    %s89 = sphi 0, %s87
    %s90 = sphi 0, %s89
    %s104 = sphi 0, %s90
    %s108 = sphi 0, %s108
    %s110 = sphi 0, %s108
    %s111 = sphi 0, %s110
    %s125 = sphi 0, %s111
    %s131 = sphi 0, %s133
    %s134 = sphi 0, %s131
    %s135 = sphi 0, %s134
    %s151 = sphi 0, %s135
  $region4: #{tcn_forward.4} parent=0 // loop_header_branch
    %14 = sbr.rel (%p12) target = $region8
  $region5: #{tcn_forward.4} parent=0 // loop_body
    %s16 = ssub.s32 %s11, 1
    %s17 = ssub.s32 %s11, 2
    %s18 = sadd.s32 %s11, 1
    %s19 = ssub.s32 %s11, %s18
    %p20 = scmp.eq.s32.totalorder %s19, 0
    %s22 = sadd.s32 %s21, 1
    %s23 = scalar_select %p20, %s21, %s22
    %p26 = pneg %p20
    %p27 = scmp.eq.s32.totalorder %s11, 1
    %p28 = por %p26, %p27
    %p29 = scmp.ne.s32.totalorder %s21, %s24
    %p30 = scmp.eq.s32.totalorder %s11, 0
    %p31 = por %p29, %p30
    %p32 = scmp.ne.s32.totalorder %s21, %s24
    %p33 = scmp.eq.s32.totalorder %s16, 1
    %p34 = por %p32, %p33
    %p35 = scmp.ne.s32.totalorder %s24, %s25
    %p36 = scmp.eq.s32.totalorder %s16, 0
    %p37 = por %p35, %p36
    %p38 = scmp.ne.s32.totalorder %s24, %s25
    %p39 = scmp.eq.s32.totalorder %s17, 1
    %p40 = por %p38, %p39
    %p42 = scmp.ne.s32.totalorder %s25, %s41
    %p43 = scmp.eq.s32.totalorder %s17, 0
    %p44 = por %p42, %p43
    %s46 = sadd.s32 %s45, 1
    %p49 = scmp.eq.s32.totalorder %s11, 1
    %p50 = scmp.ne.s32.totalorder %s45, %s47
    %p51 = scmp.eq.s32.totalorder %s11, 0
    %p52 = por %p50, %p51
    %p53 = scmp.ne.s32.totalorder %s45, %s47
    %p54 = scmp.eq.s32.totalorder %s16, 1
    %p55 = por %p53, %p54
    %p56 = scmp.ne.s32.totalorder %s47, %s48
    %p57 = scmp.eq.s32.totalorder %s16, 0
    %p58 = por %p56, %p57
    %p59 = scmp.ne.s32.totalorder %s47, %s48
    %p60 = scmp.eq.s32.totalorder %s17, 1
    %p61 = por %p59, %p60
    %p63 = scmp.ne.s32.totalorder %s48, %s62
    %p64 = scmp.eq.s32.totalorder %s17, 0
    %p65 = por %p63, %p64
    %s67 = sadd.s32 %s66, 1
    %p70 = scmp.eq.s32.totalorder %s11, 1
    %p71 = scmp.ne.s32.totalorder %s66, %s68
    %p72 = scmp.eq.s32.totalorder %s11, 0
    %p73 = por %p71, %p72
    %p74 = scmp.ne.s32.totalorder %s66, %s68
    %p75 = scmp.eq.s32.totalorder %s16, 1
    %p76 = por %p74, %p75
    %p77 = scmp.ne.s32.totalorder %s68, %s69
    %p78 = scmp.eq.s32.totalorder %s16, 0
    %p79 = por %p77, %p78
    %p80 = scmp.ne.s32.totalorder %s68, %s69
    %p81 = scmp.eq.s32.totalorder %s17, 1
    %p82 = por %p80, %p81
    %p84 = scmp.ne.s32.totalorder %s69, %s83
    %p85 = scmp.eq.s32.totalorder %s17, 0
    %p86 = por %p84, %p85
    %s88 = sadd.s32 %s87, 1
    %p91 = scmp.eq.s32.totalorder %s11, 1
    %p92 = scmp.ne.s32.totalorder %s87, %s89
    %p93 = scmp.eq.s32.totalorder %s11, 0
    %p94 = por %p92, %p93
    %p95 = scmp.ne.s32.totalorder %s87, %s89
    %p96 = scmp.eq.s32.totalorder %s16, 1
    %p97 = por %p95, %p96
    %p98 = scmp.ne.s32.totalorder %s89, %s90
    %p99 = scmp.eq.s32.totalorder %s16, 0
    %p100 = por %p98, %p99
    %p101 = scmp.ne.s32.totalorder %s89, %s90
    %p102 = scmp.eq.s32.totalorder %s17, 1
    %p103 = por %p101, %p102
    %p105 = scmp.ne.s32.totalorder %s90, %s104
    %p106 = scmp.eq.s32.totalorder %s17, 0
    %p107 = por %p105, %p106
    %s109 = sadd.s32 %s108, 1
    %p112 = scmp.eq.s32.totalorder %s11, 1
    %p113 = scmp.ne.s32.totalorder %s108, %s110
    %p114 = scmp.eq.s32.totalorder %s11, 0
    %p115 = por %p113, %p114
    %p116 = scmp.ne.s32.totalorder %s108, %s110
    %p117 = scmp.eq.s32.totalorder %s16, 1
    %p118 = por %p116, %p117
    %p119 = scmp.ne.s32.totalorder %s110, %s111
    %p120 = scmp.eq.s32.totalorder %s16, 0
    %p121 = por %p119, %p120
    %p122 = scmp.ne.s32.totalorder %s110, %s111
    %p123 = scmp.eq.s32.totalorder %s17, 1
    %p124 = por %p122, %p123
    %p126 = scmp.ne.s32.totalorder %s111, %s125
    %p127 = scmp.eq.s32.totalorder %s17, 0
    %p128 = por %p126, %p127
    %s129 = ssub.s32 %s11, %s18
    %p130 = scmp.eq.s32.totalorder %s129, 0
    %s132 = sadd.s32 %s131, 1
    %s133 = scalar_select %p130, %s131, %s132
    %p136 = pneg %p130
    %p137 = scmp.eq.s32.totalorder %s11, 1
    %p138 = por %p136, %p137
    %p139 = scmp.ne.s32.totalorder %s131, %s134
    %p140 = scmp.eq.s32.totalorder %s11, 0
    %p141 = por %p139, %p140
    %p142 = scmp.ne.s32.totalorder %s131, %s134
    %p143 = scmp.eq.s32.totalorder %s16, 1
    %p144 = por %p142, %p143
    %p145 = scmp.ne.s32.totalorder %s134, %s135
    %p146 = scmp.eq.s32.totalorder %s16, 0
    %p147 = por %p145, %p146
    %p148 = scmp.ne.s32.totalorder %s134, %s135
    %p149 = scmp.eq.s32.totalorder %s17, 1
    %p150 = por %p148, %p149
    %p152 = scmp.ne.s32.totalorder %s135, %s151
    %p153 = scmp.eq.s32.totalorder %s17, 0
    %p154 = por %p152, %p153
    %p155 = scmp.le.s32.totalorder 1, %s11
    %p156 = scmp.lt.s32.totalorder %s11, 3
    %p157 = pnand %p155, %p156
    %p158 = pneg %p157
    // Predicated region
    $region9: #{tcn_forward.4} parent=5 // pred_check
      _
    $region10: #{tcn_forward.4} parent=5 // pred_check_branch
      %160 = sbr.rel (%p157) target = $region12
    $region11: #{tcn_forward.4} parent=5 // pred_region
      %s161 = ssub.s32 %s11, 1
      // Predicated region
      $region13: #{tcn_forward.4} parent=11 // pred_check
        %p162 = pneg %p58
      $region14: #{tcn_forward.4} parent=11 // pred_check_branch
        %164 = sbr.rel (%p162) target = $region16
      $region15: #{tcn_forward.4} parent=11 // pred_region
        _
      $region16: #{tcn_forward.4} parent=11 // pred_fallthru
        _
      // Predicated region
      $region17: #{tcn_forward.4} parent=11 // pred_check
        %p165 = pneg %p79
      $region18: #{tcn_forward.4} parent=11 // pred_check_branch
        %167 = sbr.rel (%p165) target = $region20
      $region19: #{tcn_forward.4} parent=11 // pred_region
        _
      $region20: #{tcn_forward.4} parent=11 // pred_fallthru
        _
      // Predicated region
      $region21: #{tcn_forward.4} parent=11 // pred_check
        %p168 = pneg %p100
      $region22: #{tcn_forward.4} parent=11 // pred_check_branch
        %170 = sbr.rel (%p168) target = $region24
      $region23: #{tcn_forward.4} parent=11 // pred_region
        _
      $region24: #{tcn_forward.4} parent=11 // pred_fallthru
        _
      // Predicated region
      $region25: #{tcn_forward.4} parent=11 // pred_check
        %p171 = pneg %p121
      $region26: #{tcn_forward.4} parent=11 // pred_check_branch
        %173 = sbr.rel (%p171) target = $region28
      $region27: #{tcn_forward.4} parent=11 // pred_region
        _
      $region28: #{tcn_forward.4} parent=11 // pred_fallthru
        _
    $region12: #{tcn_forward.4} parent=5 // pred_fallthru
      _
    %p174 = scmp.lt.s32.totalorder %s11, 2
    // Predicated region
    $region29: #{tcn_forward.4} parent=5 // pred_check
      %p175 = pneg %p174
    $region30: #{tcn_forward.4} parent=5 // pred_check_branch
      %177 = sbr.rel (%p175) target = $region32
    $region31: #{tcn_forward.4} parent=5 // pred_region
      // Predicated region
      $region33: #{tcn_forward.4} parent=31 // pred_check
        %p178 = pneg %p31
      $region34: #{tcn_forward.4} parent=31 // pred_check_branch
        %180 = sbr.rel (%p178) target = $region36
      $region35: #{tcn_forward.4} parent=31 // pred_region
        %p181 = scmp.lt.s32.totalorder %s11, 1
        %s182 = scalar_select %p181, %s11, 1
        %s183 = smul.addr %s182, 8
        %s184 = scalar_lea.vmem %s0, %s183
      $region36: #{tcn_forward.4} parent=31 // pred_fallthru
        _
    $region32: #{tcn_forward.4} parent=5 // pred_fallthru
      _
    %p185 = scmp.le.s32.totalorder 1, %s11
    %p186 = scmp.lt.s32.totalorder %s11, 3
    %p187 = pnand %p185, %p186
    %p188 = pneg %p187
    // Predicated region
    $region37: #{tcn_forward.4} parent=5 // pred_check
      _
    $region38: #{tcn_forward.4} parent=5 // pred_check_branch
      %190 = sbr.rel (%p187) target = $region40
    $region39: #{tcn_forward.4} parent=5 // pred_region
      %s191 = ssub.s32 %s11, 1
      %p192 = scmp.lt.s32.totalorder %s16, 1
      %s193 = scalar_select %p192, %s16, 1
      %s194 = smul.addr %s193, 8
      %s195 = scalar_lea.vmem %s0, %s194
      %p196 = pneg %p37
      %p197 = pneg %p34
      %p198 = pneg %p58
      %p199 = pneg %p55
      %p200 = pneg %p79
      %p201 = pneg %p76
      %p202 = pneg %p100
      %p203 = pneg %p97
      %p204 = pneg %p121
      %p205 = pneg %p118
      %p206 = pneg %p147
      %p207 = pneg %p144
      %p208 = scmp.lt.s32.totalorder %s16, 1
      %s209 = scalar_select %p208, %s16, 1
      %s210 = smul.addr %s209, 8
      %s211 = scalar_lea.vmem %s5, %s210
      %p212 = scmp.lt.s32.totalorder %s16, 1
      %s213 = scalar_select %p212, %s16, 1
      %s214 = smul.addr %s213, 8
      %s215 = scalar_lea.vmem %s0, %s214
      %p216 = scmp.lt.s32.totalorder %s16, 1
      %s217 = scalar_select %p216, %s16, 1
      %s218 = smul.addr %s217, 8
      %s219 = scalar_lea.vmem %s5, %s218
      %v220 = vld [vmem:[%s1] sm:$0xff]
      %v221 = vld [vmem:[%s215] sm:$0xff]
      %s222 = scalar_lea.vmem %s1, 8
      %v223 = vld [vmem:[%s222] sm:$0xff]
      %225 = vrot.lane.b32.xlu0 %v221, 126
      %v226 = vpop.permute.xlu0 %225
      %vm228 = vcmask 64512
      %v230 = vsel %vm228, %v223, 0
      %232 = vmatpush.msra.mxu0 0.0
      %233 = vmatpush.msra.mxu0 0.0
      %234 = vmatpush.msra.mxu0 0.0
      %235 = vmatpush.msra.mxu0 0.0
      %236 = vmatpush.msra.mxu0 0.0
      %237 = vmatpush.msra.mxu0 0.0
      %238 = vmatpush.msra.mxu0 0.0
      %239 = vmatpush.msra.mxu0 0.0
      %240 = vmatpush.msra.mxu0 0.0
      %241 = vmatpush.msra.mxu0 0.0
      %242 = vmatpush.msra.mxu0 0.0
      %243 = vmatpush.msra.mxu0 0.0
      %244 = vmatpush.msra.mxu0 0.0
      %245 = vmatpush.msra.mxu0 0.0
      %246 = vmatpush.msra.mxu0 0.0
      %247 = vmatpush.msra.mxu0 %v226
      %248 = vmatmul.f32.gmra.mxu0 %v230
      %v249 = vpop.f32.mrf.mxu0
      %v250 = vadd.f32 0.0, %v249
      %251 = vdwg.mxu0
      %v253 = vsel %vm228, %v220, 0
      %255 = vmatpush.msra.mxu0 0.0
      %256 = vmatpush.msra.mxu0 0.0
      %257 = vmatpush.msra.mxu0 0.0
      %258 = vmatpush.msra.mxu0 0.0
      %259 = vmatpush.msra.mxu0 0.0
      %260 = vmatpush.msra.mxu0 0.0
      %261 = vmatpush.msra.mxu0 0.0
      %262 = vmatpush.msra.mxu0 0.0
      %263 = vmatpush.msra.mxu0 0.0
      %264 = vmatpush.msra.mxu0 0.0
      %265 = vmatpush.msra.mxu0 0.0
      %266 = vmatpush.msra.mxu0 0.0
      %267 = vmatpush.msra.mxu0 0.0
      %268 = vmatpush.msra.mxu0 0.0
      %269 = vmatpush.msra.mxu0 0.0
      %270 = vmatpush.msra.mxu0 %v221
      %271 = vmatmul.f32.gmra.mxu0 %v253
      %v272 = vpop.f32.mrf.mxu0
      %v273 = vadd.f32 %v250, %v272
      %274 = vdwg.mxu0
      %v275 = vld [vmem:[%s2] sm:$0xff]
      %277 = vset.pattern.permute.xlu0 0
      %278 = vperm.xlu0 %277, %v275
      %v279 = vpop.permute.xlu0 %278
      %v281 = vadd.f32 %v273, %v279
      %v282 = vmax.f32 %v281, 0.0
      %v283 = vlaneseq
      %v284 = vand.u32 %v283, 127
      %vm285 = vcmp.ge.s32.totalorder %v284, 2
      %v286 = vsel %vm285, %v282, 0.0
      %v287 = vld [vmem:[%s3] sm:$0xff]
      %s288 = scalar_lea.vmem %s3, 8
      %v289 = vld [vmem:[%s288] sm:$0xff]
      %291 = vrot.lane.b32.xlu0 %v286, 126
      %v292 = vpop.permute.xlu0 %291
      %v295 = vsel %vm228, %v289, 0
      %297 = vmatpush.msra.mxu0 0.0
      %298 = vmatpush.msra.mxu0 0.0
      %299 = vmatpush.msra.mxu0 0.0
      %300 = vmatpush.msra.mxu0 0.0
      %301 = vmatpush.msra.mxu0 0.0
      %302 = vmatpush.msra.mxu0 0.0
      %303 = vmatpush.msra.mxu0 0.0
      %304 = vmatpush.msra.mxu0 0.0
      %305 = vmatpush.msra.mxu0 0.0
      %306 = vmatpush.msra.mxu0 0.0
      %307 = vmatpush.msra.mxu0 0.0
      %308 = vmatpush.msra.mxu0 0.0
      %309 = vmatpush.msra.mxu0 0.0
      %310 = vmatpush.msra.mxu0 0.0
      %311 = vmatpush.msra.mxu0 0.0
      %312 = vmatpush.msra.mxu0 %v292
      %313 = vmatmul.f32.gmra.mxu0 %v295
      %v314 = vpop.f32.mrf.mxu0
      %v315 = vadd.f32 0.0, %v314
      %316 = vdwg.mxu0
      %v318 = vsel %vm228, %v287, 0
      %320 = vmatpush.msra.mxu0 0.0
      %321 = vmatpush.msra.mxu0 0.0
      %322 = vmatpush.msra.mxu0 0.0
      %323 = vmatpush.msra.mxu0 0.0
      %324 = vmatpush.msra.mxu0 0.0
      %325 = vmatpush.msra.mxu0 0.0
      %326 = vmatpush.msra.mxu0 0.0
      %327 = vmatpush.msra.mxu0 0.0
      %328 = vmatpush.msra.mxu0 0.0
      %329 = vmatpush.msra.mxu0 0.0
      %330 = vmatpush.msra.mxu0 0.0
      %331 = vmatpush.msra.mxu0 0.0
      %332 = vmatpush.msra.mxu0 0.0
      %333 = vmatpush.msra.mxu0 0.0
      %334 = vmatpush.msra.mxu0 0.0
      %335 = vmatpush.msra.mxu0 %v286
      %336 = vmatmul.f32.gmra.mxu0 %v318
      %v337 = vpop.f32.mrf.mxu0
      %v338 = vadd.f32 %v315, %v337
      %339 = vdwg.mxu0
      %v340 = vld [vmem:[%s4] sm:$0xff]
      %342 = vset.pattern.permute.xlu0 0
      %343 = vperm.xlu0 %342, %v340
      %v344 = vpop.permute.xlu0 %343
      %v346 = vadd.f32 %v338, %v344
      %v347 = vmax.f32 %v346, 0.0
      %348 = vrot.lane.b32.xlu0 %v221, 124
      %v349 = vpop.permute.xlu0 %348
      %v351 = vadd.f32 %v347, %v349
      %v352 = vmax.f32 %v351, 0.0
      %vm353 = vcmask 130048
      %354 = vst.msk [vmem:[%s219] sm:$0xff] %vm353, %v352
      %p355 = scmp.lt.s32.totalorder %s16, 1
      %s356 = scalar_select %p355, %s16, 1
      %s357 = smul.addr %s356, 8
      %s358 = scalar_lea.vmem %s5, %s357
      // Predicated region
      $region41: #{tcn_forward.4} parent=39 // pred_check
        %p359 = pneg %p144
      $region42: #{tcn_forward.4} parent=39 // pred_check_branch
        %361 = sbr.rel (%p359) target = $region44
      $region43: #{tcn_forward.4} parent=39 // pred_region
        _
      $region44: #{tcn_forward.4} parent=39 // pred_fallthru
        _
    $region40: #{tcn_forward.4} parent=5 // pred_fallthru
      _
    %p362 = scmp.le.s32.totalorder 2, %s11
    // Predicated region
    $region45: #{tcn_forward.4} parent=5 // pred_check
      %p363 = pneg %p362
    $region46: #{tcn_forward.4} parent=5 // pred_check_branch
      %365 = sbr.rel (%p363) target = $region48
    $region47: #{tcn_forward.4} parent=5 // pred_region
      %s366 = ssub.s32 %s11, 2
      // Predicated region
      $region49: #{tcn_forward.4} parent=47 // pred_check
        %p367 = pneg %p150
      $region50: #{tcn_forward.4} parent=47 // pred_check_branch
        %369 = sbr.rel (%p367) target = $region52
      $region51: #{tcn_forward.4} parent=47 // pred_region
        %p370 = scmp.lt.s32.totalorder %s17, 1
        %s371 = scalar_select %p370, %s17, 1
        %s372 = smul.addr %s371, 8
        %s373 = scalar_lea.vmem %s5, %s372
      $region52: #{tcn_forward.4} parent=47 // pred_fallthru
        _
    $region48: #{tcn_forward.4} parent=5 // pred_fallthru
      _
  $region6: #{tcn_forward.4} parent=0 // loop_footer
    %s15 = sadd.s32 1, %s11
  $region7: #{tcn_forward.4} parent=0 // loop_footer_branch
    %10 = sbr.rel target = $region3
  $region8: #{tcn_forward.4} parent=0 // loop_exit
    _

// kernel: tcn_forward.5
$region0: #{tcn_forward.5}
  #allocation0 [shape = 'u32[]', space=smem, size = 0x4, offset = 0x4, fixed_abs, tag = 'smem constant byte address 0x4 - core index']
  #allocation1 [shape = 'u32[72,128]{1,0:T(1,128)}', space=vmem, size = 0x9000, scoped, tag = 'internal scratch']
  %s0 = inlined_call_operand.vmem [shape: f32[2,8,24], index: 0, kind: input, shape index: {}]
  %s1 = inlined_call_operand.vmem [shape: f32[2,8,8], index: 1, kind: input, shape index: {}]
  %s2 = inlined_call_operand.vmem [shape: f32[8,1], index: 2, kind: input, shape index: {}]
  %s3 = inlined_call_operand.vmem [shape: f32[2,8,8], index: 3, kind: input, shape index: {}]
  %s4 = inlined_call_operand.vmem [shape: f32[8,1], index: 4, kind: input, shape index: {}]
  %s5 = inlined_call_operand.vmem [shape: f32[10,8], index: 5, kind: input, shape index: {}]
  %s6 = inlined_call_operand.vmem [shape: f32[10,1], index: 6, kind: input, shape index: {}]
  %s7 = inlined_call_operand.vmem [shape: f32[2,10,1], index: 7, kind: output, shape index: {}]
  %s8 = sld [smem:[#allocation0]]
  $region61: #{tcn_forward.5} parent=0
    _
  %s10 = ssub.s32 1, %s8
  %s11 = scalar_select 0, %s10, %s8
  loop: start=0, step=1, limit=4
  $region2: #{tcn_forward.5} parent=0 // loop_pre_header
    _
  $region3: #{tcn_forward.5} parent=0 // loop_header
    %s13 = sphi 0, %s17
    %p14 = scmp.ge.s32.totalorder %s13, 4
    %s23 = sphi 0, %s25
    %s26 = sphi 0, %s23
    %s27 = sphi 0, %s26
    %s43 = sphi 0, %s27
    %s47 = sphi 0, %s47
    %s49 = sphi 0, %s47
    %s50 = sphi 0, %s49
    %s64 = sphi 0, %s50
    %s68 = sphi 0, %s68
    %s70 = sphi 0, %s68
    %s71 = sphi 0, %s70
    %s85 = sphi 0, %s71
    %s89 = sphi 0, %s89
    %s91 = sphi 0, %s89
    %s92 = sphi 0, %s91
    %s106 = sphi 0, %s92
    %s110 = sphi 0, %s110
    %s112 = sphi 0, %s110
    %s113 = sphi 0, %s112
    %s127 = sphi 0, %s113
    %s131 = sphi 0, %s131
    %s133 = sphi 0, %s131
    %s134 = sphi 0, %s133
    %s148 = sphi 0, %s134
    %s152 = sphi 0, %s152
    %s154 = sphi 0, %s152
    %s155 = sphi 0, %s154
    %s169 = sphi 0, %s155
    %s175 = sphi 0, %s177
    %s178 = sphi 0, %s175
    %s179 = sphi 0, %s178
    %s195 = sphi 0, %s179
  $region4: #{tcn_forward.5} parent=0 // loop_header_branch
    %16 = sbr.rel (%p14) target = $region8
  $region5: #{tcn_forward.5} parent=0 // loop_body
    %s18 = ssub.s32 %s13, 1
    %s19 = ssub.s32 %s13, 2
    %s20 = sadd.s32 %s13, 1
    %s21 = ssub.s32 %s13, %s20
    %p22 = scmp.eq.s32.totalorder %s21, 0
    %s24 = sadd.s32 %s23, 1
    %s25 = scalar_select %p22, %s23, %s24
    %p28 = pneg %p22
    %p29 = scmp.eq.s32.totalorder %s13, 1
    %p30 = por %p28, %p29
    %p31 = scmp.ne.s32.totalorder %s23, %s26
    %p32 = scmp.eq.s32.totalorder %s13, 0
    %p33 = por %p31, %p32
    %p34 = scmp.ne.s32.totalorder %s23, %s26
    %p35 = scmp.eq.s32.totalorder %s18, 1
    %p36 = por %p34, %p35
    %p37 = scmp.ne.s32.totalorder %s26, %s27
    %p38 = scmp.eq.s32.totalorder %s18, 0
    %p39 = por %p37, %p38
    %p40 = scmp.ne.s32.totalorder %s26, %s27
    %p41 = scmp.eq.s32.totalorder %s19, 1
    %p42 = por %p40, %p41
    %p44 = scmp.ne.s32.totalorder %s27, %s43
    %p45 = scmp.eq.s32.totalorder %s19, 0
    %p46 = por %p44, %p45
    %s48 = sadd.s32 %s47, 1
    %p51 = scmp.eq.s32.totalorder %s13, 1
    %p52 = scmp.ne.s32.totalorder %s47, %s49
    %p53 = scmp.eq.s32.totalorder %s13, 0
    %p54 = por %p52, %p53
    %p55 = scmp.ne.s32.totalorder %s47, %s49
    %p56 = scmp.eq.s32.totalorder %s18, 1
    %p57 = por %p55, %p56
    %p58 = scmp.ne.s32.totalorder %s49, %s50
    %p59 = scmp.eq.s32.totalorder %s18, 0
    %p60 = por %p58, %p59
    %p61 = scmp.ne.s32.totalorder %s49, %s50
    %p62 = scmp.eq.s32.totalorder %s19, 1
    %p63 = por %p61, %p62
    %p65 = scmp.ne.s32.totalorder %s50, %s64
    %p66 = scmp.eq.s32.totalorder %s19, 0
    %p67 = por %p65, %p66
    %s69 = sadd.s32 %s68, 1
    %p72 = scmp.eq.s32.totalorder %s13, 1
    %p73 = scmp.ne.s32.totalorder %s68, %s70
    %p74 = scmp.eq.s32.totalorder %s13, 0
    %p75 = por %p73, %p74
    %p76 = scmp.ne.s32.totalorder %s68, %s70
    %p77 = scmp.eq.s32.totalorder %s18, 1
    %p78 = por %p76, %p77
    %p79 = scmp.ne.s32.totalorder %s70, %s71
    %p80 = scmp.eq.s32.totalorder %s18, 0
    %p81 = por %p79, %p80
    %p82 = scmp.ne.s32.totalorder %s70, %s71
    %p83 = scmp.eq.s32.totalorder %s19, 1
    %p84 = por %p82, %p83
    %p86 = scmp.ne.s32.totalorder %s71, %s85
    %p87 = scmp.eq.s32.totalorder %s19, 0
    %p88 = por %p86, %p87
    %s90 = sadd.s32 %s89, 1
    %p93 = scmp.eq.s32.totalorder %s13, 1
    %p94 = scmp.ne.s32.totalorder %s89, %s91
    %p95 = scmp.eq.s32.totalorder %s13, 0
    %p96 = por %p94, %p95
    %p97 = scmp.ne.s32.totalorder %s89, %s91
    %p98 = scmp.eq.s32.totalorder %s18, 1
    %p99 = por %p97, %p98
    %p100 = scmp.ne.s32.totalorder %s91, %s92
    %p101 = scmp.eq.s32.totalorder %s18, 0
    %p102 = por %p100, %p101
    %p103 = scmp.ne.s32.totalorder %s91, %s92
    %p104 = scmp.eq.s32.totalorder %s19, 1
    %p105 = por %p103, %p104
    %p107 = scmp.ne.s32.totalorder %s92, %s106
    %p108 = scmp.eq.s32.totalorder %s19, 0
    %p109 = por %p107, %p108
    %s111 = sadd.s32 %s110, 1
    %p114 = scmp.eq.s32.totalorder %s13, 1
    %p115 = scmp.ne.s32.totalorder %s110, %s112
    %p116 = scmp.eq.s32.totalorder %s13, 0
    %p117 = por %p115, %p116
    %p118 = scmp.ne.s32.totalorder %s110, %s112
    %p119 = scmp.eq.s32.totalorder %s18, 1
    %p120 = por %p118, %p119
    %p121 = scmp.ne.s32.totalorder %s112, %s113
    %p122 = scmp.eq.s32.totalorder %s18, 0
    %p123 = por %p121, %p122
    %p124 = scmp.ne.s32.totalorder %s112, %s113
    %p125 = scmp.eq.s32.totalorder %s19, 1
    %p126 = por %p124, %p125
    %p128 = scmp.ne.s32.totalorder %s113, %s127
    %p129 = scmp.eq.s32.totalorder %s19, 0
    %p130 = por %p128, %p129
    %s132 = sadd.s32 %s131, 1
    %p135 = scmp.eq.s32.totalorder %s13, 1
    %p136 = scmp.ne.s32.totalorder %s131, %s133
    %p137 = scmp.eq.s32.totalorder %s13, 0
    %p138 = por %p136, %p137
    %p139 = scmp.ne.s32.totalorder %s131, %s133
    %p140 = scmp.eq.s32.totalorder %s18, 1
    %p141 = por %p139, %p140
    %p142 = scmp.ne.s32.totalorder %s133, %s134
    %p143 = scmp.eq.s32.totalorder %s18, 0
    %p144 = por %p142, %p143
    %p145 = scmp.ne.s32.totalorder %s133, %s134
    %p146 = scmp.eq.s32.totalorder %s19, 1
    %p147 = por %p145, %p146
    %p149 = scmp.ne.s32.totalorder %s134, %s148
    %p150 = scmp.eq.s32.totalorder %s19, 0
    %p151 = por %p149, %p150
    %s153 = sadd.s32 %s152, 1
    %p156 = scmp.eq.s32.totalorder %s13, 1
    %p157 = scmp.ne.s32.totalorder %s152, %s154
    %p158 = scmp.eq.s32.totalorder %s13, 0
    %p159 = por %p157, %p158
    %p160 = scmp.ne.s32.totalorder %s152, %s154
    %p161 = scmp.eq.s32.totalorder %s18, 1
    %p162 = por %p160, %p161
    %p163 = scmp.ne.s32.totalorder %s154, %s155
    %p164 = scmp.eq.s32.totalorder %s18, 0
    %p165 = por %p163, %p164
    %p166 = scmp.ne.s32.totalorder %s154, %s155
    %p167 = scmp.eq.s32.totalorder %s19, 1
    %p168 = por %p166, %p167
    %p170 = scmp.ne.s32.totalorder %s155, %s169
    %p171 = scmp.eq.s32.totalorder %s19, 0
    %p172 = por %p170, %p171
    %s173 = ssub.s32 %s13, %s20
    %p174 = scmp.eq.s32.totalorder %s173, 0
    %s176 = sadd.s32 %s175, 1
    %s177 = scalar_select %p174, %s175, %s176
    %p180 = pneg %p174
    %p181 = scmp.eq.s32.totalorder %s13, 1
    %p182 = por %p180, %p181
    %p183 = scmp.ne.s32.totalorder %s175, %s178
    %p184 = scmp.eq.s32.totalorder %s13, 0
    %p185 = por %p183, %p184
    %p186 = scmp.ne.s32.totalorder %s175, %s178
    %p187 = scmp.eq.s32.totalorder %s18, 1
    %p188 = por %p186, %p187
    %p189 = scmp.ne.s32.totalorder %s178, %s179
    %p190 = scmp.eq.s32.totalorder %s18, 0
    %p191 = por %p189, %p190
    %p192 = scmp.ne.s32.totalorder %s178, %s179
    %p193 = scmp.eq.s32.totalorder %s19, 1
    %p194 = por %p192, %p193
    %p196 = scmp.ne.s32.totalorder %s179, %s195
    %p197 = scmp.eq.s32.totalorder %s19, 0
    %p198 = por %p196, %p197
    %p199 = scmp.le.s32.totalorder 1, %s13
    %p200 = scmp.lt.s32.totalorder %s13, 3
    %p201 = pnand %p199, %p200
    %p202 = pneg %p201
    // Predicated region
    $region9: #{tcn_forward.5} parent=5 // pred_check
      _
    $region10: #{tcn_forward.5} parent=5 // pred_check_branch
      %204 = sbr.rel (%p201) target = $region12
    $region11: #{tcn_forward.5} parent=5 // pred_region
      %s205 = ssub.s32 %s13, 1
      // Predicated region
      $region13: #{tcn_forward.5} parent=11 // pred_check
        %p206 = pneg %p60
      $region14: #{tcn_forward.5} parent=11 // pred_check_branch
        %208 = sbr.rel (%p206) target = $region16
      $region15: #{tcn_forward.5} parent=11 // pred_region
        _
      $region16: #{tcn_forward.5} parent=11 // pred_fallthru
        _
      // Predicated region
      $region17: #{tcn_forward.5} parent=11 // pred_check
        %p209 = pneg %p81
      $region18: #{tcn_forward.5} parent=11 // pred_check_branch
        %211 = sbr.rel (%p209) target = $region20
      $region19: #{tcn_forward.5} parent=11 // pred_region
        _
      $region20: #{tcn_forward.5} parent=11 // pred_fallthru
        _
      // Predicated region
      $region21: #{tcn_forward.5} parent=11 // pred_check
        %p212 = pneg %p102
      $region22: #{tcn_forward.5} parent=11 // pred_check_branch
        %214 = sbr.rel (%p212) target = $region24
      $region23: #{tcn_forward.5} parent=11 // pred_region
        _
      $region24: #{tcn_forward.5} parent=11 // pred_fallthru
        _
      // Predicated region
      $region25: #{tcn_forward.5} parent=11 // pred_check
        %p215 = pneg %p123
      $region26: #{tcn_forward.5} parent=11 // pred_check_branch
        %217 = sbr.rel (%p215) target = $region28
      $region27: #{tcn_forward.5} parent=11 // pred_region
        _
      $region28: #{tcn_forward.5} parent=11 // pred_fallthru
        _
      // Predicated region
      $region29: #{tcn_forward.5} parent=11 // pred_check
        %p218 = pneg %p144
      $region30: #{tcn_forward.5} parent=11 // pred_check_branch
        %220 = sbr.rel (%p218) target = $region32
      $region31: #{tcn_forward.5} parent=11 // pred_region
        _
      $region32: #{tcn_forward.5} parent=11 // pred_fallthru
        _
      // Predicated region
      $region33: #{tcn_forward.5} parent=11 // pred_check
        %p221 = pneg %p165
      $region34: #{tcn_forward.5} parent=11 // pred_check_branch
        %223 = sbr.rel (%p221) target = $region36
      $region35: #{tcn_forward.5} parent=11 // pred_region
        _
      $region36: #{tcn_forward.5} parent=11 // pred_fallthru
        _
    $region12: #{tcn_forward.5} parent=5 // pred_fallthru
      _
    %p224 = scmp.lt.s32.totalorder %s13, 2
    // Predicated region
    $region37: #{tcn_forward.5} parent=5 // pred_check
      %p225 = pneg %p224
    $region38: #{tcn_forward.5} parent=5 // pred_check_branch
      %227 = sbr.rel (%p225) target = $region40
    $region39: #{tcn_forward.5} parent=5 // pred_region
      // Predicated region
      $region41: #{tcn_forward.5} parent=39 // pred_check
        %p228 = pneg %p33
      $region42: #{tcn_forward.5} parent=39 // pred_check_branch
        %230 = sbr.rel (%p228) target = $region44
      $region43: #{tcn_forward.5} parent=39 // pred_region
        %p231 = scmp.lt.s32.totalorder %s13, 1
        %s232 = scalar_select %p231, %s13, 1
        %s233 = smul.addr %s232, 8
        %s234 = scalar_lea.vmem %s0, %s233
      $region44: #{tcn_forward.5} parent=39 // pred_fallthru
        _
    $region40: #{tcn_forward.5} parent=5 // pred_fallthru
      _
    %p235 = scmp.le.s32.totalorder 1, %s13
    %p236 = scmp.lt.s32.totalorder %s13, 3
    %p237 = pnand %p235, %p236
    %p238 = pneg %p237
    // Predicated region
    $region45: #{tcn_forward.5} parent=5 // pred_check
      _
    $region46: #{tcn_forward.5} parent=5 // pred_check_branch
      %240 = sbr.rel (%p237) target = $region48
    $region47: #{tcn_forward.5} parent=5 // pred_region
      %s241 = ssub.s32 %s13, 1
      %p242 = scmp.lt.s32.totalorder %s18, 1
      %s243 = scalar_select %p242, %s18, 1
      %s244 = smul.addr %s243, 8
      %s245 = scalar_lea.vmem %s0, %s244
      %p246 = pneg %p39
      %p247 = pneg %p36
      %p248 = pneg %p60
      %p249 = pneg %p57
      %p250 = pneg %p81
      %p251 = pneg %p78
      %p252 = pneg %p102
      %p253 = pneg %p99
      %p254 = pneg %p123
      %p255 = pneg %p120
      %p256 = pneg %p144
      %p257 = pneg %p141
      %p258 = pneg %p165
      %p259 = pneg %p162
      %p260 = pneg %p191
      %p261 = pneg %p188
      %p262 = scmp.lt.s32.totalorder %s18, 1
      %s263 = scalar_select %p262, %s18, 1
      %s264 = smul.addr %s263, 2
      %s265 = smul.addr %s264, 8
      %s266 = scalar_lea.vmem %s7, %s265
      %p267 = scmp.lt.s32.totalorder %s18, 1
      %s268 = scalar_select %p267, %s18, 1
      %s269 = smul.addr %s268, 8
      %s270 = scalar_lea.vmem %s0, %s269
      %p271 = scmp.lt.s32.totalorder %s18, 1
      %s272 = scalar_select %p271, %s18, 1
      %s273 = smul.addr %s272, 2
      %s274 = smul.addr %s273, 8
      %s275 = scalar_lea.vmem %s7, %s274
      %v276 = vld [vmem:[%s1] sm:$0xff]
      %v277 = vld [vmem:[%s270] sm:$0xff]
      %s278 = scalar_lea.vmem %s1, 8
      %v279 = vld [vmem:[%s278] sm:$0xff]
      %281 = vrot.lane.b32.xlu0 %v277, 124
      %v282 = vpop.permute.xlu0 %281
      %vm284 = vcmask 64512
      %v286 = vsel %vm284, %v279, 0
      %288 = vmatpush.msra.mxu0 0.0
      %289 = vmatpush.msra.mxu0 0.0
      %290 = vmatpush.msra.mxu0 0.0
      %291 = vmatpush.msra.mxu0 0.0
      %292 = vmatpush.msra.mxu0 0.0
      %293 = vmatpush.msra.mxu0 0.0
      %294 = vmatpush.msra.mxu0 0.0
      %295 = vmatpush.msra.mxu0 0.0
      %296 = vmatpush.msra.mxu0 0.0
      %297 = vmatpush.msra.mxu0 0.0
      %298 = vmatpush.msra.mxu0 0.0
      %299 = vmatpush.msra.mxu0 0.0
      %300 = vmatpush.msra.mxu0 0.0
      %301 = vmatpush.msra.mxu0 0.0
      %302 = vmatpush.msra.mxu0 0.0
      %303 = vmatpush.msra.mxu0 %v282
      %304 = vmatmul.f32.gmra.mxu0 %v286
      %v305 = vpop.f32.mrf.mxu0
      %v306 = vadd.f32 0.0, %v305
      %307 = vdwg.mxu0
      %v309 = vsel %vm284, %v276, 0
      %311 = vmatpush.msra.mxu0 0.0
      %312 = vmatpush.msra.mxu0 0.0
      %313 = vmatpush.msra.mxu0 0.0
      %314 = vmatpush.msra.mxu0 0.0
      %315 = vmatpush.msra.mxu0 0.0
      %316 = vmatpush.msra.mxu0 0.0
      %317 = vmatpush.msra.mxu0 0.0
      %318 = vmatpush.msra.mxu0 0.0
      %319 = vmatpush.msra.mxu0 0.0
      %320 = vmatpush.msra.mxu0 0.0
      %321 = vmatpush.msra.mxu0 0.0
      %322 = vmatpush.msra.mxu0 0.0
      %323 = vmatpush.msra.mxu0 0.0
      %324 = vmatpush.msra.mxu0 0.0
      %325 = vmatpush.msra.mxu0 0.0
      %326 = vmatpush.msra.mxu0 %v277
      %327 = vmatmul.f32.gmra.mxu0 %v309
      %v328 = vpop.f32.mrf.mxu0
      %v329 = vadd.f32 %v306, %v328
      %330 = vdwg.mxu0
      %v331 = vld [vmem:[%s2] sm:$0xff]
      %333 = vset.pattern.permute.xlu0 0
      %334 = vperm.xlu0 %333, %v331
      %v335 = vpop.permute.xlu0 %334
      %v337 = vadd.f32 %v329, %v335
      %v338 = vmax.f32 %v337, 0.0
      %v339 = vlaneseq
      %v340 = vand.u32 %v339, 127
      %vm341 = vcmp.ge.s32.totalorder %v340, 4
      %v342 = vsel %vm341, %v338, 0.0
      %v343 = vld [vmem:[%s3] sm:$0xff]
      %s344 = scalar_lea.vmem %s3, 8
      %v345 = vld [vmem:[%s344] sm:$0xff]
      %347 = vrot.lane.b32.xlu0 %v342, 124
      %v348 = vpop.permute.xlu0 %347
      %v351 = vsel %vm284, %v345, 0
      %353 = vmatpush.msra.mxu0 0.0
      %354 = vmatpush.msra.mxu0 0.0
      %355 = vmatpush.msra.mxu0 0.0
      %356 = vmatpush.msra.mxu0 0.0
      %357 = vmatpush.msra.mxu0 0.0
      %358 = vmatpush.msra.mxu0 0.0
      %359 = vmatpush.msra.mxu0 0.0
      %360 = vmatpush.msra.mxu0 0.0
      %361 = vmatpush.msra.mxu0 0.0
      %362 = vmatpush.msra.mxu0 0.0
      %363 = vmatpush.msra.mxu0 0.0
      %364 = vmatpush.msra.mxu0 0.0
      %365 = vmatpush.msra.mxu0 0.0
      %366 = vmatpush.msra.mxu0 0.0
      %367 = vmatpush.msra.mxu0 0.0
      %368 = vmatpush.msra.mxu0 %v348
      %369 = vmatmul.f32.gmra.mxu0 %v351
      %v370 = vpop.f32.mrf.mxu0
      %v371 = vadd.f32 0.0, %v370
      %372 = vdwg.mxu0
      %v374 = vsel %vm284, %v343, 0
      %376 = vmatpush.msra.mxu0 0.0
      %377 = vmatpush.msra.mxu0 0.0
      %378 = vmatpush.msra.mxu0 0.0
      %379 = vmatpush.msra.mxu0 0.0
      %380 = vmatpush.msra.mxu0 0.0
      %381 = vmatpush.msra.mxu0 0.0
      %382 = vmatpush.msra.mxu0 0.0
      %383 = vmatpush.msra.mxu0 0.0
      %384 = vmatpush.msra.mxu0 0.0
      %385 = vmatpush.msra.mxu0 0.0
      %386 = vmatpush.msra.mxu0 0.0
      %387 = vmatpush.msra.mxu0 0.0
      %388 = vmatpush.msra.mxu0 0.0
      %389 = vmatpush.msra.mxu0 0.0
      %390 = vmatpush.msra.mxu0 0.0
      %391 = vmatpush.msra.mxu0 %v342
      %392 = vmatmul.f32.gmra.mxu0 %v374
      %v393 = vpop.f32.mrf.mxu0
      %v394 = vadd.f32 %v371, %v393
      %395 = vdwg.mxu0
      %v396 = vld [vmem:[%s4] sm:$0xff]
      %398 = vset.pattern.permute.xlu0 0
      %399 = vperm.xlu0 %398, %v396
      %v400 = vpop.permute.xlu0 %399
      %v402 = vadd.f32 %v394, %v400
      %v403 = vmax.f32 %v402, 0.0
      %404 = vrot.lane.b32.xlu0 %v277, 120
      %v405 = vpop.permute.xlu0 %404
      %v407 = vadd.f32 %v403, %v405
      %v408 = vmax.f32 %v407, 0.0
      %v409 = vld [vmem:[%s5] sm:$0xff]
      %v410 = vld [vmem:[%s5 + $0x8] sm:$0x3]
      %v411 = vld [vmem:[%s6] sm:$0xff]
      %v412 = vld [vmem:[%s6 + $0x8] sm:$0x3]
      %414 = vrot.lane.b32.xlu0 %v408, 113
      %v415 = vpop.permute.xlu0 %414
      %v418 = vsel %vm284, %v409, 0
      %v421 = vsel %vm284, %v410, 0
      %423 = vmatpush.msra.mxu0 0.0
      %424 = vmatpush.msra.mxu0 0.0
      %425 = vmatpush.msra.mxu0 0.0
      %426 = vmatpush.msra.mxu0 0.0
      %427 = vmatpush.msra.mxu0 0.0
      %428 = vmatpush.msra.mxu0 0.0
      %429 = vmatpush.msra.mxu0 0.0
      %430 = vmatpush.msra.mxu0 0.0
      %431 = vmatpush.msra.mxu0 0.0
      %432 = vmatpush.msra.mxu0 0.0
      %433 = vmatpush.msra.mxu0 0.0
      %434 = vmatpush.msra.mxu0 0.0
      %435 = vmatpush.msra.mxu0 0.0
      %436 = vmatpush.msra.mxu0 0.0
      %437 = vmatpush.msra.mxu0 0.0
      %438 = vmatpush.msra.mxu0 %v415
      %439 = vmatmul.f32.gmra.mxu0 %v418
      %v440 = vpop.f32.mrf.mxu0
      %v441 = vadd.f32 %v411, %v440
      %442 = vmatmul.f32.gmra.mxu0 %v421
      %v443 = vpop.f32.mrf.mxu0
      %v444 = vadd.f32 %v412, %v443
      %445 = vdwg.mxu0
      %vm446 = vcmask 7168
      %v447 = vsel %vm446, %v441, -inf
      %vm448 = vcmask 1024
      %v449 = vsel %vm448, %v444, -inf
      %v450 = vmax.f32 %v447, %v449
      %v451 = vrot.slane %v450, 4
      %v452 = vmax.f32 %v450, %v451
      %v453 = vrot.slane %v452, 2
      %v454 = vmax.f32 %v452, %v453
      %v455 = vrot.slane %v454, 1
      %v456 = vmax.f32 %v454, %v455
      %v457 = vsub.f32 %v441, %v456
      %v458 = vsub.f32 %v444, %v456
      %v459 = vmul.f32 %v457, 1.442695
      %v460 = vpow.pop %v459
      %v461 = vmul.f32 %v458, 1.442695
      %v462 = vpow.pop %v461
      %v463 = vsel %vm446, %v460, 0.0
      %v464 = vsel %vm448, %v462, 0.0
      %v465 = vadd.f32 %v463, %v464
      %v466 = vrot.slane %v465, 4
      %v467 = vadd.f32 %v465, %v466
      %v468 = vrot.slane %v467, 2
      %v469 = vadd.f32 %v467, %v468
      %v470 = vrot.slane %v469, 1
      %v471 = vadd.f32 %v469, %v470
      %v472 = vlog2.pop %v471
      %v473 = vmul.f32 %v472, 0.6931472
      %v474 = vsub.f32 %v457, %v473
      %v475 = vsub.f32 %v458, %v473
      %476 = vst.msk [vmem:[%s275] sm:$0xff] %vm446, %v474
      %477 = vst.msk [vmem:[%s275 + $0x8] sm:$0x3] %vm448, %v475
      %p478 = scmp.lt.s32.totalorder %s18, 1
      %s479 = scalar_select %p478, %s18, 1
      %s480 = smul.addr %s479, 2
      %s481 = smul.addr %s480, 8
      %s482 = scalar_lea.vmem %s7, %s481
      // Predicated region
      $region49: #{tcn_forward.5} parent=47 // pred_check
        %p483 = pneg %p188
      $region50: #{tcn_forward.5} parent=47 // pred_check_branch
        %485 = sbr.rel (%p483) target = $region52
      $region51: #{tcn_forward.5} parent=47 // pred_region
        _
      $region52: #{tcn_forward.5} parent=47 // pred_fallthru
        _
    $region48: #{tcn_forward.5} parent=5 // pred_fallthru
      _
    %p486 = scmp.le.s32.totalorder 2, %s13
    // Predicated region
    $region53: #{tcn_forward.5} parent=5 // pred_check
      %p487 = pneg %p486
    $region54: #{tcn_forward.5} parent=5 // pred_check_branch
      %489 = sbr.rel (%p487) target = $region56
    $region55: #{tcn_forward.5} parent=5 // pred_region
      %s490 = ssub.s32 %s13, 2
      // Predicated region
      $region57: #{tcn_forward.5} parent=55 // pred_check
        %p491 = pneg %p194
      $region58: #{tcn_forward.5} parent=55 // pred_check_branch
        %493 = sbr.rel (%p491) target = $region60
      $region59: #{tcn_forward.5} parent=55 // pred_region
        %p494 = scmp.lt.s32.totalorder %s19, 1
        %s495 = scalar_select %p494, %s19, 1
        %s496 = smul.addr %s495, 2
        %s497 = smul.addr %s496, 8
        %s498 = scalar_lea.vmem %s7, %s497
      $region60: #{tcn_forward.5} parent=55 // pred_fallthru
        _
    $region56: #{tcn_forward.5} parent=5 // pred_fallthru
      _
  $region6: #{tcn_forward.5} parent=0 // loop_footer
    %s17 = sadd.s32 1, %s13
  $region7: #{tcn_forward.5} parent=0 // loop_footer_branch
    %12 = sbr.rel target = $region3
  $region8: #{tcn_forward.5} parent=0 // loop_exit
    _

</llo_original>
